<compile_context>
chip_gen: v7x
topology: tpu7x:2x2x1
jax: 0.10.0
libtpu: 0.0.40
codegen_flags: <defaults>
</compile_context>

<pallas_src>
import functools
import math

import jax
import jax.numpy as jnp
from jax.experimental import pallas as pl
from jax.experimental.pallas import tpu as pltpu


def _round_up(x, m):
    return (x + m - 1) // m * m


def _embed_gather_kernel(ids_ref, table_ref, out_ref, rows_ref, copy_sems, *,
                         scale, tokens, window):
    """Gather `tokens` embedding rows with pipelined row DMAs, scale, and emit
    one dense (tokens, D) output slab.

    ids_ref   : (n_pad,) int32 scalar-prefetch ref (SMEM) holding all token ids
    table_ref : (V, D) embedding table (VMEM-resident block OR raw HBM ref)
    out_ref   : (tokens, D) output block in VMEM
    rows_ref  : (tokens, D) VMEM scratch receiving the gathered rows
    copy_sems : (window,) DMA semaphores -> `window` row copies kept in flight
    """
    vocab = table_ref.shape[0]
    base = pl.program_id(0) * tokens

    def start_row_copy(j):
        # Clamp defensively so a bad token id can never DMA out of the table.
        row = jnp.clip(ids_ref[base + j], 0, vocab - 1)
        pltpu.make_async_copy(
            table_ref.at[row], rows_ref.at[j], copy_sems.at[j % window]
        ).start()

    # Prime the pipeline: `window` row gathers in flight.
    @pl.loop(0, window, unroll=True)
    def _(j):
        start_row_copy(j)

    # Steady state: retire row j, immediately reissue on the freed sem slot.
    @pl.loop(0, tokens)
    def _(j):
        pltpu.make_async_copy(
            table_ref.at[0], rows_ref.at[j], copy_sems.at[j % window]
        ).wait()

        @pl.when(j + window < tokens)
        def _():
            start_row_copy(j + window)

    # Single dense, sublane/lane-aligned scaled write of the whole slab.
    out_ref[...] = (rows_ref[...] * scale).astype(out_ref.dtype)


def embeddings_forward(ids, table, *, block_tokens=256, gather_mode="auto",
                       vmem_table_bytes_limit=4 * 1024 * 1024):
    """ids: (B, S) int token indices, table: (V, D) -> (B, S, D) = table[ids] * sqrt(D)."""
    B, S = ids.shape
    V, D = table.shape
    scale = float(math.sqrt(D))
    itemsize = jnp.dtype(table.dtype).itemsize

    n_tok = B * S
    flat_ids = ids.reshape(-1).astype(jnp.int32)

    # Tokens per grid step: multiple of 8 (sublane-dense output), large enough to
    # amortize per-step overhead, capped so each (T, D) buffer stays ~<=4 MiB
    # (safe for v7x's 64 MiB VMEM with double-buffered outputs + scratch).
    max_rows_by_vmem = max(8, (4 * 1024 * 1024) // max(1, D * itemsize))
    T = min(block_tokens, max_rows_by_vmem)
    T = max(8, (T // 8) * 8)
    T = min(T, _round_up(n_tok, 8))          # don't over-pad tiny inputs
    n_pad = _round_up(n_tok, T)
    if n_pad != n_tok:
        flat_ids = jnp.pad(flat_ids, (0, n_pad - n_tok))   # pad with token 0 (valid row)

    # Small tables: keep the whole table resident in VMEM (loaded from HBM once,
    # reused by every grid step); large tables stay in HBM and are row-gathered.
    if gather_mode == "auto":
        gather_mode = "vmem" if V * D * itemsize <= vmem_table_bytes_limit else "hbm"
    if gather_mode == "vmem":
        table_spec = pl.BlockSpec((V, D), lambda i, ids_ref: (0, 0))
    elif gather_mode == "hbm":
        table_spec = pl.BlockSpec(memory_space=pl.ANY)
    else:
        raise ValueError(f"unknown gather_mode: {gather_mode}")

    window = min(16, T)                      # 8-16 row DMAs in flight
    grid = (n_pad // T,)

    kernel = functools.partial(_embed_gather_kernel,
                               scale=scale, tokens=T, window=window)

    out_flat = pl.pallas_call(
        kernel,
        out_shape=jax.ShapeDtypeStruct((n_pad, D), table.dtype),
        grid_spec=pltpu.PrefetchScalarGridSpec(
            num_scalar_prefetch=1,            # flat token ids land in SMEM
            grid=grid,
            in_specs=[table_spec],
            out_specs=pl.BlockSpec((T, D), lambda i, ids_ref: (i, 0)),
            scratch_shapes=[
                pltpu.VMEM((T, D), table.dtype),       # gathered rows
                pltpu.SemaphoreType.DMA((window,)),    # in-flight row copies
            ],
        ),
        compiler_params=pltpu.CompilerParams(
            # Output blocks are independent across token tiles -> shard over the
            # 2 TensorCores on v7x; no effect on single-TC v5e/v6e.
            dimension_semantics=("parallel",),
            vmem_limit_bytes=32 * 1024 * 1024,
        ),
    )(flat_ids, table)

    return out_flat[:n_tok].reshape(B, S, D)


if __name__ == "__main__":
    # Small deterministic setup consistent with the module: vocab=64, d_model=128,
    # batch=2, seq=8.
    vocab, d_model = 64, 128
    B, S = 2, 8

    key = jax.random.PRNGKey(0)
    k_tab, k_ids = jax.random.split(key)
    table = jax.random.normal(k_tab, (vocab, d_model), dtype=jnp.float32)
    ids = jax.random.randint(k_ids, (B, S), 0, vocab, dtype=jnp.int32)

    ref = jnp.take(table, ids, axis=0) * math.sqrt(d_model)

    # Path 1 (auto -> "vmem" here): table resident in VMEM, on-chip row gathers.
    out = jax.block_until_ready(embeddings_forward(ids, table))
    assert out.shape == (B, S, d_model)
    assert jnp.allclose(out, ref, atol=1e-5, rtol=1e-5)

    # Path 2: large-table code path (table kept in HBM, pipelined row-gather DMAs).
    out_hbm = jax.block_until_ready(embeddings_forward(ids, table, gather_mode="hbm"))
    assert jnp.allclose(out_hbm, ref, atol=1e-5, rtol=1e-5)

    print("KERNEL_OK")
</pallas_src>

<mosaic_0001>
module attributes {stable_mosaic.version = 11 : i64} {
  func.func @_embed_gather_kernel(%arg0: i32, %arg1: memref<16xi32, #tpu.memory_space<smem>>, %arg2: memref<64x128xf32, #tpu.memory_space<vmem>>, %arg3: memref<16x128xf32, #tpu.memory_space<vmem>>, %arg4: memref<16x128xf32, #tpu.memory_space<vmem>>, %arg5: memref<16x!tpu.dma_semaphore, #tpu.memory_space<semaphore_mem>>) attributes {dimension_semantics = [#tpu.dimension_semantics<parallel>], iteration_bounds = array<i64: 1>, scalar_prefetch = 1 : i64, scratch_operands = 2 : i64, tpu.core_type = #tpu.core_type<tc>, window_params = [{pipeline_mode = #tpu.pipeline_mode<synchronous>, transform_indices = @transform_0, window_bounds = array<i64: 64, 128>}, {transform_indices = @transform_1, window_bounds = array<i64: 16, 128>}]} {
    %c16_i32 = arith.constant 16 : i32
    %0 = arith.muli %arg0, %c16_i32 : i32
    %c0_i32 = arith.constant 0 : i32
    %c1_i32 = arith.constant 1 : i32
    %1 = arith.muli %c0_i32, %c1_i32 : i32
    %c0_i32_0 = arith.constant 0 : i32
    %2 = arith.addi %c0_i32_0, %1 : i32
    %3 = arith.addi %0, %2 : i32
    %4 = arith.index_cast %3 : i32 to index
    %5 = memref.load %arg1[%4] : memref<16xi32, #tpu.memory_space<smem>>
    %c0_i32_1 = arith.constant 0 : i32
    %c63_i32 = arith.constant 63 : i32
    %6 = arith.maxsi %c0_i32_1, %5 : i32
    %7 = arith.minsi %c63_i32, %6 : i32
    %c16_i32_2 = arith.constant 16 : i32
    %c0_i32_3 = arith.constant 0 : i32
    %8 = arith.cmpi eq, %c16_i32_2, %c0_i32_3 : i32
    %c1_i32_4 = arith.constant 1 : i32
    %9 = arith.select %8, %c1_i32_4, %c16_i32_2 : i32
    %10 = arith.remsi %2, %9 : i32
    %c0_i32_5 = arith.constant 0 : i32
    %11 = arith.cmpi ne, %10, %c0_i32_5 : i32
    %c0_i32_6 = arith.constant 0 : i32
    %12 = arith.cmpi slt, %10, %c0_i32_6 : i32
    %c0_i32_7 = arith.constant 0 : i32
    %13 = arith.cmpi slt, %9, %c0_i32_7 : i32
    %14 = arith.xori %12, %13 : i1
    %15 = arith.andi %14, %11 : i1
    %16 = arith.addi %10, %9 : i32
    %17 = arith.select %15, %16, %10 : i32
    %c0_i32_8 = arith.constant 0 : i32
    %18 = tpu.memref_slice %arg2[%7, %c0_i32_8] : memref<64x128xf32, #tpu.memory_space<vmem>> -> memref<1x128xf32, #tpu.memory_space<vmem>>
    %19 = tpu.memref_squeeze %18 : memref<1x128xf32, #tpu.memory_space<vmem>> -> memref<128xf32, #tpu.memory_space<vmem>>
    %c0_i32_9 = arith.constant 0 : i32
    %20 = tpu.memref_slice %arg4[%2, %c0_i32_9] : memref<16x128xf32, #tpu.memory_space<vmem>> -> memref<1x128xf32, #tpu.memory_space<vmem>>
    %21 = tpu.memref_squeeze %20 : memref<1x128xf32, #tpu.memory_space<vmem>> -> memref<128xf32, #tpu.memory_space<vmem>>
    %22 = tpu.memref_slice %arg5[%17] : memref<16x!tpu.dma_semaphore, #tpu.memory_space<semaphore_mem>> -> memref<1x!tpu.dma_semaphore, #tpu.memory_space<semaphore_mem>>
    %23 = tpu.memref_squeeze %22 : memref<1x!tpu.dma_semaphore, #tpu.memory_space<semaphore_mem>> -> memref<!tpu.dma_semaphore, #tpu.memory_space<semaphore_mem>>
    tpu.enqueue_dma source(%19 : memref<128xf32, #tpu.memory_space<vmem>>) target(%21 : memref<128xf32, #tpu.memory_space<vmem>>) target_semaphore(%23 : memref<!tpu.dma_semaphore, #tpu.memory_space<semaphore_mem>>)
    %c1_i32_10 = arith.constant 1 : i32
    %c1_i32_11 = arith.constant 1 : i32
    %24 = arith.muli %c1_i32_10, %c1_i32_11 : i32
    %c0_i32_12 = arith.constant 0 : i32
    %25 = arith.addi %c0_i32_12, %24 : i32
    %26 = arith.addi %0, %25 : i32
    %27 = arith.index_cast %26 : i32 to index
    %28 = memref.load %arg1[%27] : memref<16xi32, #tpu.memory_space<smem>>
    %c0_i32_13 = arith.constant 0 : i32
    %c63_i32_14 = arith.constant 63 : i32
    %29 = arith.maxsi %c0_i32_13, %28 : i32
    %30 = arith.minsi %c63_i32_14, %29 : i32
    %c16_i32_15 = arith.constant 16 : i32
    %c0_i32_16 = arith.constant 0 : i32
    %31 = arith.cmpi eq, %c16_i32_15, %c0_i32_16 : i32
    %c1_i32_17 = arith.constant 1 : i32
    %32 = arith.select %31, %c1_i32_17, %c16_i32_15 : i32
    %33 = arith.remsi %25, %32 : i32
    %c0_i32_18 = arith.constant 0 : i32
    %34 = arith.cmpi ne, %33, %c0_i32_18 : i32
    %c0_i32_19 = arith.constant 0 : i32
    %35 = arith.cmpi slt, %33, %c0_i32_19 : i32
    %c0_i32_20 = arith.constant 0 : i32
    %36 = arith.cmpi slt, %32, %c0_i32_20 : i32
    %37 = arith.xori %35, %36 : i1
    %38 = arith.andi %37, %34 : i1
    %39 = arith.addi %33, %32 : i32
    %40 = arith.select %38, %39, %33 : i32
    %c0_i32_21 = arith.constant 0 : i32
    %41 = tpu.memref_slice %arg2[%30, %c0_i32_21] : memref<64x128xf32, #tpu.memory_space<vmem>> -> memref<1x128xf32, #tpu.memory_space<vmem>>
    %42 = tpu.memref_squeeze %41 : memref<1x128xf32, #tpu.memory_space<vmem>> -> memref<128xf32, #tpu.memory_space<vmem>>
    %c0_i32_22 = arith.constant 0 : i32
    %43 = tpu.memref_slice %arg4[%25, %c0_i32_22] : memref<16x128xf32, #tpu.memory_space<vmem>> -> memref<1x128xf32, #tpu.memory_space<vmem>>
    %44 = tpu.memref_squeeze %43 : memref<1x128xf32, #tpu.memory_space<vmem>> -> memref<128xf32, #tpu.memory_space<vmem>>
    %45 = tpu.memref_slice %arg5[%40] : memref<16x!tpu.dma_semaphore, #tpu.memory_space<semaphore_mem>> -> memref<1x!tpu.dma_semaphore, #tpu.memory_space<semaphore_mem>>
    %46 = tpu.memref_squeeze %45 : memref<1x!tpu.dma_semaphore, #tpu.memory_space<semaphore_mem>> -> memref<!tpu.dma_semaphore, #tpu.memory_space<semaphore_mem>>
    tpu.enqueue_dma source(%42 : memref<128xf32, #tpu.memory_space<vmem>>) target(%44 : memref<128xf32, #tpu.memory_space<vmem>>) target_semaphore(%46 : memref<!tpu.dma_semaphore, #tpu.memory_space<semaphore_mem>>)
    %c2_i32 = arith.constant 2 : i32
    %c1_i32_23 = arith.constant 1 : i32
    %47 = arith.muli %c2_i32, %c1_i32_23 : i32
    %c0_i32_24 = arith.constant 0 : i32
    %48 = arith.addi %c0_i32_24, %47 : i32
    %49 = arith.addi %0, %48 : i32
    %50 = arith.index_cast %49 : i32 to index
    %51 = memref.load %arg1[%50] : memref<16xi32, #tpu.memory_space<smem>>
    %c0_i32_25 = arith.constant 0 : i32
    %c63_i32_26 = arith.constant 63 : i32
    %52 = arith.maxsi %c0_i32_25, %51 : i32
    %53 = arith.minsi %c63_i32_26, %52 : i32
    %c16_i32_27 = arith.constant 16 : i32
    %c0_i32_28 = arith.constant 0 : i32
    %54 = arith.cmpi eq, %c16_i32_27, %c0_i32_28 : i32
    %c1_i32_29 = arith.constant 1 : i32
    %55 = arith.select %54, %c1_i32_29, %c16_i32_27 : i32
    %56 = arith.remsi %48, %55 : i32
    %c0_i32_30 = arith.constant 0 : i32
    %57 = arith.cmpi ne, %56, %c0_i32_30 : i32
    %c0_i32_31 = arith.constant 0 : i32
    %58 = arith.cmpi slt, %56, %c0_i32_31 : i32
    %c0_i32_32 = arith.constant 0 : i32
    %59 = arith.cmpi slt, %55, %c0_i32_32 : i32
    %60 = arith.xori %58, %59 : i1
    %61 = arith.andi %60, %57 : i1
    %62 = arith.addi %56, %55 : i32
    %63 = arith.select %61, %62, %56 : i32
    %c0_i32_33 = arith.constant 0 : i32
    %64 = tpu.memref_slice %arg2[%53, %c0_i32_33] : memref<64x128xf32, #tpu.memory_space<vmem>> -> memref<1x128xf32, #tpu.memory_space<vmem>>
    %65 = tpu.memref_squeeze %64 : memref<1x128xf32, #tpu.memory_space<vmem>> -> memref<128xf32, #tpu.memory_space<vmem>>
    %c0_i32_34 = arith.constant 0 : i32
    %66 = tpu.memref_slice %arg4[%48, %c0_i32_34] : memref<16x128xf32, #tpu.memory_space<vmem>> -> memref<1x128xf32, #tpu.memory_space<vmem>>
    %67 = tpu.memref_squeeze %66 : memref<1x128xf32, #tpu.memory_space<vmem>> -> memref<128xf32, #tpu.memory_space<vmem>>
    %68 = tpu.memref_slice %arg5[%63] : memref<16x!tpu.dma_semaphore, #tpu.memory_space<semaphore_mem>> -> memref<1x!tpu.dma_semaphore, #tpu.memory_space<semaphore_mem>>
    %69 = tpu.memref_squeeze %68 : memref<1x!tpu.dma_semaphore, #tpu.memory_space<semaphore_mem>> -> memref<!tpu.dma_semaphore, #tpu.memory_space<semaphore_mem>>
    tpu.enqueue_dma source(%65 : memref<128xf32, #tpu.memory_space<vmem>>) target(%67 : memref<128xf32, #tpu.memory_space<vmem>>) target_semaphore(%69 : memref<!tpu.dma_semaphore, #tpu.memory_space<semaphore_mem>>)
    %c3_i32 = arith.constant 3 : i32
    %c1_i32_35 = arith.constant 1 : i32
    %70 = arith.muli %c3_i32, %c1_i32_35 : i32
    %c0_i32_36 = arith.constant 0 : i32
    %71 = arith.addi %c0_i32_36, %70 : i32
    %72 = arith.addi %0, %71 : i32
    %73 = arith.index_cast %72 : i32 to index
    %74 = memref.load %arg1[%73] : memref<16xi32, #tpu.memory_space<smem>>
    %c0_i32_37 = arith.constant 0 : i32
    %c63_i32_38 = arith.constant 63 : i32
    %75 = arith.maxsi %c0_i32_37, %74 : i32
    %76 = arith.minsi %c63_i32_38, %75 : i32
    %c16_i32_39 = arith.constant 16 : i32
    %c0_i32_40 = arith.constant 0 : i32
    %77 = arith.cmpi eq, %c16_i32_39, %c0_i32_40 : i32
    %c1_i32_41 = arith.constant 1 : i32
    %78 = arith.select %77, %c1_i32_41, %c16_i32_39 : i32
    %79 = arith.remsi %71, %78 : i32
    %c0_i32_42 = arith.constant 0 : i32
    %80 = arith.cmpi ne, %79, %c0_i32_42 : i32
    %c0_i32_43 = arith.constant 0 : i32
    %81 = arith.cmpi slt, %79, %c0_i32_43 : i32
    %c0_i32_44 = arith.constant 0 : i32
    %82 = arith.cmpi slt, %78, %c0_i32_44 : i32
    %83 = arith.xori %81, %82 : i1
    %84 = arith.andi %83, %80 : i1
    %85 = arith.addi %79, %78 : i32
    %86 = arith.select %84, %85, %79 : i32
    %c0_i32_45 = arith.constant 0 : i32
    %87 = tpu.memref_slice %arg2[%76, %c0_i32_45] : memref<64x128xf32, #tpu.memory_space<vmem>> -> memref<1x128xf32, #tpu.memory_space<vmem>>
    %88 = tpu.memref_squeeze %87 : memref<1x128xf32, #tpu.memory_space<vmem>> -> memref<128xf32, #tpu.memory_space<vmem>>
    %c0_i32_46 = arith.constant 0 : i32
    %89 = tpu.memref_slice %arg4[%71, %c0_i32_46] : memref<16x128xf32, #tpu.memory_space<vmem>> -> memref<1x128xf32, #tpu.memory_space<vmem>>
    %90 = tpu.memref_squeeze %89 : memref<1x128xf32, #tpu.memory_space<vmem>> -> memref<128xf32, #tpu.memory_space<vmem>>
    %91 = tpu.memref_slice %arg5[%86] : memref<16x!tpu.dma_semaphore, #tpu.memory_space<semaphore_mem>> -> memref<1x!tpu.dma_semaphore, #tpu.memory_space<semaphore_mem>>
    %92 = tpu.memref_squeeze %91 : memref<1x!tpu.dma_semaphore, #tpu.memory_space<semaphore_mem>> -> memref<!tpu.dma_semaphore, #tpu.memory_space<semaphore_mem>>
    tpu.enqueue_dma source(%88 : memref<128xf32, #tpu.memory_space<vmem>>) target(%90 : memref<128xf32, #tpu.memory_space<vmem>>) target_semaphore(%92 : memref<!tpu.dma_semaphore, #tpu.memory_space<semaphore_mem>>)
    %c4_i32 = arith.constant 4 : i32
    %c1_i32_47 = arith.constant 1 : i32
    %93 = arith.muli %c4_i32, %c1_i32_47 : i32
    %c0_i32_48 = arith.constant 0 : i32
    %94 = arith.addi %c0_i32_48, %93 : i32
    %95 = arith.addi %0, %94 : i32
    %96 = arith.index_cast %95 : i32 to index
    %97 = memref.load %arg1[%96] : memref<16xi32, #tpu.memory_space<smem>>
    %c0_i32_49 = arith.constant 0 : i32
    %c63_i32_50 = arith.constant 63 : i32
    %98 = arith.maxsi %c0_i32_49, %97 : i32
    %99 = arith.minsi %c63_i32_50, %98 : i32
    %c16_i32_51 = arith.constant 16 : i32
    %c0_i32_52 = arith.constant 0 : i32
    %100 = arith.cmpi eq, %c16_i32_51, %c0_i32_52 : i32
    %c1_i32_53 = arith.constant 1 : i32
    %101 = arith.select %100, %c1_i32_53, %c16_i32_51 : i32
    %102 = arith.remsi %94, %101 : i32
    %c0_i32_54 = arith.constant 0 : i32
    %103 = arith.cmpi ne, %102, %c0_i32_54 : i32
    %c0_i32_55 = arith.constant 0 : i32
    %104 = arith.cmpi slt, %102, %c0_i32_55 : i32
    %c0_i32_56 = arith.constant 0 : i32
    %105 = arith.cmpi slt, %101, %c0_i32_56 : i32
    %106 = arith.xori %104, %105 : i1
    %107 = arith.andi %106, %103 : i1
    %108 = arith.addi %102, %101 : i32
    %109 = arith.select %107, %108, %102 : i32
    %c0_i32_57 = arith.constant 0 : i32
    %110 = tpu.memref_slice %arg2[%99, %c0_i32_57] : memref<64x128xf32, #tpu.memory_space<vmem>> -> memref<1x128xf32, #tpu.memory_space<vmem>>
    %111 = tpu.memref_squeeze %110 : memref<1x128xf32, #tpu.memory_space<vmem>> -> memref<128xf32, #tpu.memory_space<vmem>>
    %c0_i32_58 = arith.constant 0 : i32
    %112 = tpu.memref_slice %arg4[%94, %c0_i32_58] : memref<16x128xf32, #tpu.memory_space<vmem>> -> memref<1x128xf32, #tpu.memory_space<vmem>>
    %113 = tpu.memref_squeeze %112 : memref<1x128xf32, #tpu.memory_space<vmem>> -> memref<128xf32, #tpu.memory_space<vmem>>
    %114 = tpu.memref_slice %arg5[%109] : memref<16x!tpu.dma_semaphore, #tpu.memory_space<semaphore_mem>> -> memref<1x!tpu.dma_semaphore, #tpu.memory_space<semaphore_mem>>
    %115 = tpu.memref_squeeze %114 : memref<1x!tpu.dma_semaphore, #tpu.memory_space<semaphore_mem>> -> memref<!tpu.dma_semaphore, #tpu.memory_space<semaphore_mem>>
    tpu.enqueue_dma source(%111 : memref<128xf32, #tpu.memory_space<vmem>>) target(%113 : memref<128xf32, #tpu.memory_space<vmem>>) target_semaphore(%115 : memref<!tpu.dma_semaphore, #tpu.memory_space<semaphore_mem>>)
    %c5_i32 = arith.constant 5 : i32
    %c1_i32_59 = arith.constant 1 : i32
    %116 = arith.muli %c5_i32, %c1_i32_59 : i32
    %c0_i32_60 = arith.constant 0 : i32
    %117 = arith.addi %c0_i32_60, %116 : i32
    %118 = arith.addi %0, %117 : i32
    %119 = arith.index_cast %118 : i32 to index
    %120 = memref.load %arg1[%119] : memref<16xi32, #tpu.memory_space<smem>>
    %c0_i32_61 = arith.constant 0 : i32
    %c63_i32_62 = arith.constant 63 : i32
    %121 = arith.maxsi %c0_i32_61, %120 : i32
    %122 = arith.minsi %c63_i32_62, %121 : i32
    %c16_i32_63 = arith.constant 16 : i32
    %c0_i32_64 = arith.constant 0 : i32
    %123 = arith.cmpi eq, %c16_i32_63, %c0_i32_64 : i32
    %c1_i32_65 = arith.constant 1 : i32
    %124 = arith.select %123, %c1_i32_65, %c16_i32_63 : i32
    %125 = arith.remsi %117, %124 : i32
    %c0_i32_66 = arith.constant 0 : i32
    %126 = arith.cmpi ne, %125, %c0_i32_66 : i32
    %c0_i32_67 = arith.constant 0 : i32
    %127 = arith.cmpi slt, %125, %c0_i32_67 : i32
    %c0_i32_68 = arith.constant 0 : i32
    %128 = arith.cmpi slt, %124, %c0_i32_68 : i32
    %129 = arith.xori %127, %128 : i1
    %130 = arith.andi %129, %126 : i1
    %131 = arith.addi %125, %124 : i32
    %132 = arith.select %130, %131, %125 : i32
    %c0_i32_69 = arith.constant 0 : i32
    %133 = tpu.memref_slice %arg2[%122, %c0_i32_69] : memref<64x128xf32, #tpu.memory_space<vmem>> -> memref<1x128xf32, #tpu.memory_space<vmem>>
    %134 = tpu.memref_squeeze %133 : memref<1x128xf32, #tpu.memory_space<vmem>> -> memref<128xf32, #tpu.memory_space<vmem>>
    %c0_i32_70 = arith.constant 0 : i32
    %135 = tpu.memref_slice %arg4[%117, %c0_i32_70] : memref<16x128xf32, #tpu.memory_space<vmem>> -> memref<1x128xf32, #tpu.memory_space<vmem>>
    %136 = tpu.memref_squeeze %135 : memref<1x128xf32, #tpu.memory_space<vmem>> -> memref<128xf32, #tpu.memory_space<vmem>>
    %137 = tpu.memref_slice %arg5[%132] : memref<16x!tpu.dma_semaphore, #tpu.memory_space<semaphore_mem>> -> memref<1x!tpu.dma_semaphore, #tpu.memory_space<semaphore_mem>>
    %138 = tpu.memref_squeeze %137 : memref<1x!tpu.dma_semaphore, #tpu.memory_space<semaphore_mem>> -> memref<!tpu.dma_semaphore, #tpu.memory_space<semaphore_mem>>
    tpu.enqueue_dma source(%134 : memref<128xf32, #tpu.memory_space<vmem>>) target(%136 : memref<128xf32, #tpu.memory_space<vmem>>) target_semaphore(%138 : memref<!tpu.dma_semaphore, #tpu.memory_space<semaphore_mem>>)
    %c6_i32 = arith.constant 6 : i32
    %c1_i32_71 = arith.constant 1 : i32
    %139 = arith.muli %c6_i32, %c1_i32_71 : i32
    %c0_i32_72 = arith.constant 0 : i32
    %140 = arith.addi %c0_i32_72, %139 : i32
    %141 = arith.addi %0, %140 : i32
    %142 = arith.index_cast %141 : i32 to index
    %143 = memref.load %arg1[%142] : memref<16xi32, #tpu.memory_space<smem>>
    %c0_i32_73 = arith.constant 0 : i32
    %c63_i32_74 = arith.constant 63 : i32
    %144 = arith.maxsi %c0_i32_73, %143 : i32
    %145 = arith.minsi %c63_i32_74, %144 : i32
    %c16_i32_75 = arith.constant 16 : i32
    %c0_i32_76 = arith.constant 0 : i32
    %146 = arith.cmpi eq, %c16_i32_75, %c0_i32_76 : i32
    %c1_i32_77 = arith.constant 1 : i32
    %147 = arith.select %146, %c1_i32_77, %c16_i32_75 : i32
    %148 = arith.remsi %140, %147 : i32
    %c0_i32_78 = arith.constant 0 : i32
    %149 = arith.cmpi ne, %148, %c0_i32_78 : i32
    %c0_i32_79 = arith.constant 0 : i32
    %150 = arith.cmpi slt, %148, %c0_i32_79 : i32
    %c0_i32_80 = arith.constant 0 : i32
    %151 = arith.cmpi slt, %147, %c0_i32_80 : i32
    %152 = arith.xori %150, %151 : i1
    %153 = arith.andi %152, %149 : i1
    %154 = arith.addi %148, %147 : i32
    %155 = arith.select %153, %154, %148 : i32
    %c0_i32_81 = arith.constant 0 : i32
    %156 = tpu.memref_slice %arg2[%145, %c0_i32_81] : memref<64x128xf32, #tpu.memory_space<vmem>> -> memref<1x128xf32, #tpu.memory_space<vmem>>
    %157 = tpu.memref_squeeze %156 : memref<1x128xf32, #tpu.memory_space<vmem>> -> memref<128xf32, #tpu.memory_space<vmem>>
    %c0_i32_82 = arith.constant 0 : i32
    %158 = tpu.memref_slice %arg4[%140, %c0_i32_82] : memref<16x128xf32, #tpu.memory_space<vmem>> -> memref<1x128xf32, #tpu.memory_space<vmem>>
    %159 = tpu.memref_squeeze %158 : memref<1x128xf32, #tpu.memory_space<vmem>> -> memref<128xf32, #tpu.memory_space<vmem>>
    %160 = tpu.memref_slice %arg5[%155] : memref<16x!tpu.dma_semaphore, #tpu.memory_space<semaphore_mem>> -> memref<1x!tpu.dma_semaphore, #tpu.memory_space<semaphore_mem>>
    %161 = tpu.memref_squeeze %160 : memref<1x!tpu.dma_semaphore, #tpu.memory_space<semaphore_mem>> -> memref<!tpu.dma_semaphore, #tpu.memory_space<semaphore_mem>>
    tpu.enqueue_dma source(%157 : memref<128xf32, #tpu.memory_space<vmem>>) target(%159 : memref<128xf32, #tpu.memory_space<vmem>>) target_semaphore(%161 : memref<!tpu.dma_semaphore, #tpu.memory_space<semaphore_mem>>)
    %c7_i32 = arith.constant 7 : i32
    %c1_i32_83 = arith.constant 1 : i32
    %162 = arith.muli %c7_i32, %c1_i32_83 : i32
    %c0_i32_84 = arith.constant 0 : i32
    %163 = arith.addi %c0_i32_84, %162 : i32
    %164 = arith.addi %0, %163 : i32
    %165 = arith.index_cast %164 : i32 to index
    %166 = memref.load %arg1[%165] : memref<16xi32, #tpu.memory_space<smem>>
    %c0_i32_85 = arith.constant 0 : i32
    %c63_i32_86 = arith.constant 63 : i32
    %167 = arith.maxsi %c0_i32_85, %166 : i32
    %168 = arith.minsi %c63_i32_86, %167 : i32
    %c16_i32_87 = arith.constant 16 : i32
    %c0_i32_88 = arith.constant 0 : i32
    %169 = arith.cmpi eq, %c16_i32_87, %c0_i32_88 : i32
    %c1_i32_89 = arith.constant 1 : i32
    %170 = arith.select %169, %c1_i32_89, %c16_i32_87 : i32
    %171 = arith.remsi %163, %170 : i32
    %c0_i32_90 = arith.constant 0 : i32
    %172 = arith.cmpi ne, %171, %c0_i32_90 : i32
    %c0_i32_91 = arith.constant 0 : i32
    %173 = arith.cmpi slt, %171, %c0_i32_91 : i32
    %c0_i32_92 = arith.constant 0 : i32
    %174 = arith.cmpi slt, %170, %c0_i32_92 : i32
    %175 = arith.xori %173, %174 : i1
    %176 = arith.andi %175, %172 : i1
    %177 = arith.addi %171, %170 : i32
    %178 = arith.select %176, %177, %171 : i32
    %c0_i32_93 = arith.constant 0 : i32
    %179 = tpu.memref_slice %arg2[%168, %c0_i32_93] : memref<64x128xf32, #tpu.memory_space<vmem>> -> memref<1x128xf32, #tpu.memory_space<vmem>>
    %180 = tpu.memref_squeeze %179 : memref<1x128xf32, #tpu.memory_space<vmem>> -> memref<128xf32, #tpu.memory_space<vmem>>
    %c0_i32_94 = arith.constant 0 : i32
    %181 = tpu.memref_slice %arg4[%163, %c0_i32_94] : memref<16x128xf32, #tpu.memory_space<vmem>> -> memref<1x128xf32, #tpu.memory_space<vmem>>
    %182 = tpu.memref_squeeze %181 : memref<1x128xf32, #tpu.memory_space<vmem>> -> memref<128xf32, #tpu.memory_space<vmem>>
    %183 = tpu.memref_slice %arg5[%178] : memref<16x!tpu.dma_semaphore, #tpu.memory_space<semaphore_mem>> -> memref<1x!tpu.dma_semaphore, #tpu.memory_space<semaphore_mem>>
    %184 = tpu.memref_squeeze %183 : memref<1x!tpu.dma_semaphore, #tpu.memory_space<semaphore_mem>> -> memref<!tpu.dma_semaphore, #tpu.memory_space<semaphore_mem>>
    tpu.enqueue_dma source(%180 : memref<128xf32, #tpu.memory_space<vmem>>) target(%182 : memref<128xf32, #tpu.memory_space<vmem>>) target_semaphore(%184 : memref<!tpu.dma_semaphore, #tpu.memory_space<semaphore_mem>>)
    %c8_i32 = arith.constant 8 : i32
    %c1_i32_95 = arith.constant 1 : i32
    %185 = arith.muli %c8_i32, %c1_i32_95 : i32
    %c0_i32_96 = arith.constant 0 : i32
    %186 = arith.addi %c0_i32_96, %185 : i32
    %187 = arith.addi %0, %186 : i32
    %188 = arith.index_cast %187 : i32 to index
    %189 = memref.load %arg1[%188] : memref<16xi32, #tpu.memory_space<smem>>
    %c0_i32_97 = arith.constant 0 : i32
    %c63_i32_98 = arith.constant 63 : i32
    %190 = arith.maxsi %c0_i32_97, %189 : i32
    %191 = arith.minsi %c63_i32_98, %190 : i32
    %c16_i32_99 = arith.constant 16 : i32
    %c0_i32_100 = arith.constant 0 : i32
    %192 = arith.cmpi eq, %c16_i32_99, %c0_i32_100 : i32
    %c1_i32_101 = arith.constant 1 : i32
    %193 = arith.select %192, %c1_i32_101, %c16_i32_99 : i32
    %194 = arith.remsi %186, %193 : i32
    %c0_i32_102 = arith.constant 0 : i32
    %195 = arith.cmpi ne, %194, %c0_i32_102 : i32
    %c0_i32_103 = arith.constant 0 : i32
    %196 = arith.cmpi slt, %194, %c0_i32_103 : i32
    %c0_i32_104 = arith.constant 0 : i32
    %197 = arith.cmpi slt, %193, %c0_i32_104 : i32
    %198 = arith.xori %196, %197 : i1
    %199 = arith.andi %198, %195 : i1
    %200 = arith.addi %194, %193 : i32
    %201 = arith.select %199, %200, %194 : i32
    %c0_i32_105 = arith.constant 0 : i32
    %202 = tpu.memref_slice %arg2[%191, %c0_i32_105] : memref<64x128xf32, #tpu.memory_space<vmem>> -> memref<1x128xf32, #tpu.memory_space<vmem>>
    %203 = tpu.memref_squeeze %202 : memref<1x128xf32, #tpu.memory_space<vmem>> -> memref<128xf32, #tpu.memory_space<vmem>>
    %c0_i32_106 = arith.constant 0 : i32
    %204 = tpu.memref_slice %arg4[%186, %c0_i32_106] : memref<16x128xf32, #tpu.memory_space<vmem>> -> memref<1x128xf32, #tpu.memory_space<vmem>>
    %205 = tpu.memref_squeeze %204 : memref<1x128xf32, #tpu.memory_space<vmem>> -> memref<128xf32, #tpu.memory_space<vmem>>
    %206 = tpu.memref_slice %arg5[%201] : memref<16x!tpu.dma_semaphore, #tpu.memory_space<semaphore_mem>> -> memref<1x!tpu.dma_semaphore, #tpu.memory_space<semaphore_mem>>
    %207 = tpu.memref_squeeze %206 : memref<1x!tpu.dma_semaphore, #tpu.memory_space<semaphore_mem>> -> memref<!tpu.dma_semaphore, #tpu.memory_space<semaphore_mem>>
    tpu.enqueue_dma source(%203 : memref<128xf32, #tpu.memory_space<vmem>>) target(%205 : memref<128xf32, #tpu.memory_space<vmem>>) target_semaphore(%207 : memref<!tpu.dma_semaphore, #tpu.memory_space<semaphore_mem>>)
    %c9_i32 = arith.constant 9 : i32
    %c1_i32_107 = arith.constant 1 : i32
    %208 = arith.muli %c9_i32, %c1_i32_107 : i32
    %c0_i32_108 = arith.constant 0 : i32
    %209 = arith.addi %c0_i32_108, %208 : i32
    %210 = arith.addi %0, %209 : i32
    %211 = arith.index_cast %210 : i32 to index
    %212 = memref.load %arg1[%211] : memref<16xi32, #tpu.memory_space<smem>>
    %c0_i32_109 = arith.constant 0 : i32
    %c63_i32_110 = arith.constant 63 : i32
    %213 = arith.maxsi %c0_i32_109, %212 : i32
    %214 = arith.minsi %c63_i32_110, %213 : i32
    %c16_i32_111 = arith.constant 16 : i32
    %c0_i32_112 = arith.constant 0 : i32
    %215 = arith.cmpi eq, %c16_i32_111, %c0_i32_112 : i32
    %c1_i32_113 = arith.constant 1 : i32
    %216 = arith.select %215, %c1_i32_113, %c16_i32_111 : i32
    %217 = arith.remsi %209, %216 : i32
    %c0_i32_114 = arith.constant 0 : i32
    %218 = arith.cmpi ne, %217, %c0_i32_114 : i32
    %c0_i32_115 = arith.constant 0 : i32
    %219 = arith.cmpi slt, %217, %c0_i32_115 : i32
    %c0_i32_116 = arith.constant 0 : i32
    %220 = arith.cmpi slt, %216, %c0_i32_116 : i32
    %221 = arith.xori %219, %220 : i1
    %222 = arith.andi %221, %218 : i1
    %223 = arith.addi %217, %216 : i32
    %224 = arith.select %222, %223, %217 : i32
    %c0_i32_117 = arith.constant 0 : i32
    %225 = tpu.memref_slice %arg2[%214, %c0_i32_117] : memref<64x128xf32, #tpu.memory_space<vmem>> -> memref<1x128xf32, #tpu.memory_space<vmem>>
    %226 = tpu.memref_squeeze %225 : memref<1x128xf32, #tpu.memory_space<vmem>> -> memref<128xf32, #tpu.memory_space<vmem>>
    %c0_i32_118 = arith.constant 0 : i32
    %227 = tpu.memref_slice %arg4[%209, %c0_i32_118] : memref<16x128xf32, #tpu.memory_space<vmem>> -> memref<1x128xf32, #tpu.memory_space<vmem>>
    %228 = tpu.memref_squeeze %227 : memref<1x128xf32, #tpu.memory_space<vmem>> -> memref<128xf32, #tpu.memory_space<vmem>>
    %229 = tpu.memref_slice %arg5[%224] : memref<16x!tpu.dma_semaphore, #tpu.memory_space<semaphore_mem>> -> memref<1x!tpu.dma_semaphore, #tpu.memory_space<semaphore_mem>>
    %230 = tpu.memref_squeeze %229 : memref<1x!tpu.dma_semaphore, #tpu.memory_space<semaphore_mem>> -> memref<!tpu.dma_semaphore, #tpu.memory_space<semaphore_mem>>
    tpu.enqueue_dma source(%226 : memref<128xf32, #tpu.memory_space<vmem>>) target(%228 : memref<128xf32, #tpu.memory_space<vmem>>) target_semaphore(%230 : memref<!tpu.dma_semaphore, #tpu.memory_space<semaphore_mem>>)
    %c10_i32 = arith.constant 10 : i32
    %c1_i32_119 = arith.constant 1 : i32
    %231 = arith.muli %c10_i32, %c1_i32_119 : i32
    %c0_i32_120 = arith.constant 0 : i32
    %232 = arith.addi %c0_i32_120, %231 : i32
    %233 = arith.addi %0, %232 : i32
    %234 = arith.index_cast %233 : i32 to index
    %235 = memref.load %arg1[%234] : memref<16xi32, #tpu.memory_space<smem>>
    %c0_i32_121 = arith.constant 0 : i32
    %c63_i32_122 = arith.constant 63 : i32
    %236 = arith.maxsi %c0_i32_121, %235 : i32
    %237 = arith.minsi %c63_i32_122, %236 : i32
    %c16_i32_123 = arith.constant 16 : i32
    %c0_i32_124 = arith.constant 0 : i32
    %238 = arith.cmpi eq, %c16_i32_123, %c0_i32_124 : i32
    %c1_i32_125 = arith.constant 1 : i32
    %239 = arith.select %238, %c1_i32_125, %c16_i32_123 : i32
    %240 = arith.remsi %232, %239 : i32
    %c0_i32_126 = arith.constant 0 : i32
    %241 = arith.cmpi ne, %240, %c0_i32_126 : i32
    %c0_i32_127 = arith.constant 0 : i32
    %242 = arith.cmpi slt, %240, %c0_i32_127 : i32
    %c0_i32_128 = arith.constant 0 : i32
    %243 = arith.cmpi slt, %239, %c0_i32_128 : i32
    %244 = arith.xori %242, %243 : i1
    %245 = arith.andi %244, %241 : i1
    %246 = arith.addi %240, %239 : i32
    %247 = arith.select %245, %246, %240 : i32
    %c0_i32_129 = arith.constant 0 : i32
    %248 = tpu.memref_slice %arg2[%237, %c0_i32_129] : memref<64x128xf32, #tpu.memory_space<vmem>> -> memref<1x128xf32, #tpu.memory_space<vmem>>
    %249 = tpu.memref_squeeze %248 : memref<1x128xf32, #tpu.memory_space<vmem>> -> memref<128xf32, #tpu.memory_space<vmem>>
    %c0_i32_130 = arith.constant 0 : i32
    %250 = tpu.memref_slice %arg4[%232, %c0_i32_130] : memref<16x128xf32, #tpu.memory_space<vmem>> -> memref<1x128xf32, #tpu.memory_space<vmem>>
    %251 = tpu.memref_squeeze %250 : memref<1x128xf32, #tpu.memory_space<vmem>> -> memref<128xf32, #tpu.memory_space<vmem>>
    %252 = tpu.memref_slice %arg5[%247] : memref<16x!tpu.dma_semaphore, #tpu.memory_space<semaphore_mem>> -> memref<1x!tpu.dma_semaphore, #tpu.memory_space<semaphore_mem>>
    %253 = tpu.memref_squeeze %252 : memref<1x!tpu.dma_semaphore, #tpu.memory_space<semaphore_mem>> -> memref<!tpu.dma_semaphore, #tpu.memory_space<semaphore_mem>>
    tpu.enqueue_dma source(%249 : memref<128xf32, #tpu.memory_space<vmem>>) target(%251 : memref<128xf32, #tpu.memory_space<vmem>>) target_semaphore(%253 : memref<!tpu.dma_semaphore, #tpu.memory_space<semaphore_mem>>)
    %c11_i32 = arith.constant 11 : i32
    %c1_i32_131 = arith.constant 1 : i32
    %254 = arith.muli %c11_i32, %c1_i32_131 : i32
    %c0_i32_132 = arith.constant 0 : i32
    %255 = arith.addi %c0_i32_132, %254 : i32
    %256 = arith.addi %0, %255 : i32
    %257 = arith.index_cast %256 : i32 to index
    %258 = memref.load %arg1[%257] : memref<16xi32, #tpu.memory_space<smem>>
    %c0_i32_133 = arith.constant 0 : i32
    %c63_i32_134 = arith.constant 63 : i32
    %259 = arith.maxsi %c0_i32_133, %258 : i32
    %260 = arith.minsi %c63_i32_134, %259 : i32
    %c16_i32_135 = arith.constant 16 : i32
    %c0_i32_136 = arith.constant 0 : i32
    %261 = arith.cmpi eq, %c16_i32_135, %c0_i32_136 : i32
    %c1_i32_137 = arith.constant 1 : i32
    %262 = arith.select %261, %c1_i32_137, %c16_i32_135 : i32
    %263 = arith.remsi %255, %262 : i32
    %c0_i32_138 = arith.constant 0 : i32
    %264 = arith.cmpi ne, %263, %c0_i32_138 : i32
    %c0_i32_139 = arith.constant 0 : i32
    %265 = arith.cmpi slt, %263, %c0_i32_139 : i32
    %c0_i32_140 = arith.constant 0 : i32
    %266 = arith.cmpi slt, %262, %c0_i32_140 : i32
    %267 = arith.xori %265, %266 : i1
    %268 = arith.andi %267, %264 : i1
    %269 = arith.addi %263, %262 : i32
    %270 = arith.select %268, %269, %263 : i32
    %c0_i32_141 = arith.constant 0 : i32
    %271 = tpu.memref_slice %arg2[%260, %c0_i32_141] : memref<64x128xf32, #tpu.memory_space<vmem>> -> memref<1x128xf32, #tpu.memory_space<vmem>>
    %272 = tpu.memref_squeeze %271 : memref<1x128xf32, #tpu.memory_space<vmem>> -> memref<128xf32, #tpu.memory_space<vmem>>
    %c0_i32_142 = arith.constant 0 : i32
    %273 = tpu.memref_slice %arg4[%255, %c0_i32_142] : memref<16x128xf32, #tpu.memory_space<vmem>> -> memref<1x128xf32, #tpu.memory_space<vmem>>
    %274 = tpu.memref_squeeze %273 : memref<1x128xf32, #tpu.memory_space<vmem>> -> memref<128xf32, #tpu.memory_space<vmem>>
    %275 = tpu.memref_slice %arg5[%270] : memref<16x!tpu.dma_semaphore, #tpu.memory_space<semaphore_mem>> -> memref<1x!tpu.dma_semaphore, #tpu.memory_space<semaphore_mem>>
    %276 = tpu.memref_squeeze %275 : memref<1x!tpu.dma_semaphore, #tpu.memory_space<semaphore_mem>> -> memref<!tpu.dma_semaphore, #tpu.memory_space<semaphore_mem>>
    tpu.enqueue_dma source(%272 : memref<128xf32, #tpu.memory_space<vmem>>) target(%274 : memref<128xf32, #tpu.memory_space<vmem>>) target_semaphore(%276 : memref<!tpu.dma_semaphore, #tpu.memory_space<semaphore_mem>>)
    %c12_i32 = arith.constant 12 : i32
    %c1_i32_143 = arith.constant 1 : i32
    %277 = arith.muli %c12_i32, %c1_i32_143 : i32
    %c0_i32_144 = arith.constant 0 : i32
    %278 = arith.addi %c0_i32_144, %277 : i32
    %279 = arith.addi %0, %278 : i32
    %280 = arith.index_cast %279 : i32 to index
    %281 = memref.load %arg1[%280] : memref<16xi32, #tpu.memory_space<smem>>
    %c0_i32_145 = arith.constant 0 : i32
    %c63_i32_146 = arith.constant 63 : i32
    %282 = arith.maxsi %c0_i32_145, %281 : i32
    %283 = arith.minsi %c63_i32_146, %282 : i32
    %c16_i32_147 = arith.constant 16 : i32
    %c0_i32_148 = arith.constant 0 : i32
    %284 = arith.cmpi eq, %c16_i32_147, %c0_i32_148 : i32
    %c1_i32_149 = arith.constant 1 : i32
    %285 = arith.select %284, %c1_i32_149, %c16_i32_147 : i32
    %286 = arith.remsi %278, %285 : i32
    %c0_i32_150 = arith.constant 0 : i32
    %287 = arith.cmpi ne, %286, %c0_i32_150 : i32
    %c0_i32_151 = arith.constant 0 : i32
    %288 = arith.cmpi slt, %286, %c0_i32_151 : i32
    %c0_i32_152 = arith.constant 0 : i32
    %289 = arith.cmpi slt, %285, %c0_i32_152 : i32
    %290 = arith.xori %288, %289 : i1
    %291 = arith.andi %290, %287 : i1
    %292 = arith.addi %286, %285 : i32
    %293 = arith.select %291, %292, %286 : i32
    %c0_i32_153 = arith.constant 0 : i32
    %294 = tpu.memref_slice %arg2[%283, %c0_i32_153] : memref<64x128xf32, #tpu.memory_space<vmem>> -> memref<1x128xf32, #tpu.memory_space<vmem>>
    %295 = tpu.memref_squeeze %294 : memref<1x128xf32, #tpu.memory_space<vmem>> -> memref<128xf32, #tpu.memory_space<vmem>>
    %c0_i32_154 = arith.constant 0 : i32
    %296 = tpu.memref_slice %arg4[%278, %c0_i32_154] : memref<16x128xf32, #tpu.memory_space<vmem>> -> memref<1x128xf32, #tpu.memory_space<vmem>>
    %297 = tpu.memref_squeeze %296 : memref<1x128xf32, #tpu.memory_space<vmem>> -> memref<128xf32, #tpu.memory_space<vmem>>
    %298 = tpu.memref_slice %arg5[%293] : memref<16x!tpu.dma_semaphore, #tpu.memory_space<semaphore_mem>> -> memref<1x!tpu.dma_semaphore, #tpu.memory_space<semaphore_mem>>
    %299 = tpu.memref_squeeze %298 : memref<1x!tpu.dma_semaphore, #tpu.memory_space<semaphore_mem>> -> memref<!tpu.dma_semaphore, #tpu.memory_space<semaphore_mem>>
    tpu.enqueue_dma source(%295 : memref<128xf32, #tpu.memory_space<vmem>>) target(%297 : memref<128xf32, #tpu.memory_space<vmem>>) target_semaphore(%299 : memref<!tpu.dma_semaphore, #tpu.memory_space<semaphore_mem>>)
    %c13_i32 = arith.constant 13 : i32
    %c1_i32_155 = arith.constant 1 : i32
    %300 = arith.muli %c13_i32, %c1_i32_155 : i32
    %c0_i32_156 = arith.constant 0 : i32
    %301 = arith.addi %c0_i32_156, %300 : i32
    %302 = arith.addi %0, %301 : i32
    %303 = arith.index_cast %302 : i32 to index
    %304 = memref.load %arg1[%303] : memref<16xi32, #tpu.memory_space<smem>>
    %c0_i32_157 = arith.constant 0 : i32
    %c63_i32_158 = arith.constant 63 : i32
    %305 = arith.maxsi %c0_i32_157, %304 : i32
    %306 = arith.minsi %c63_i32_158, %305 : i32
    %c16_i32_159 = arith.constant 16 : i32
    %c0_i32_160 = arith.constant 0 : i32
    %307 = arith.cmpi eq, %c16_i32_159, %c0_i32_160 : i32
    %c1_i32_161 = arith.constant 1 : i32
    %308 = arith.select %307, %c1_i32_161, %c16_i32_159 : i32
    %309 = arith.remsi %301, %308 : i32
    %c0_i32_162 = arith.constant 0 : i32
    %310 = arith.cmpi ne, %309, %c0_i32_162 : i32
    %c0_i32_163 = arith.constant 0 : i32
    %311 = arith.cmpi slt, %309, %c0_i32_163 : i32
    %c0_i32_164 = arith.constant 0 : i32
    %312 = arith.cmpi slt, %308, %c0_i32_164 : i32
    %313 = arith.xori %311, %312 : i1
    %314 = arith.andi %313, %310 : i1
    %315 = arith.addi %309, %308 : i32
    %316 = arith.select %314, %315, %309 : i32
    %c0_i32_165 = arith.constant 0 : i32
    %317 = tpu.memref_slice %arg2[%306, %c0_i32_165] : memref<64x128xf32, #tpu.memory_space<vmem>> -> memref<1x128xf32, #tpu.memory_space<vmem>>
    %318 = tpu.memref_squeeze %317 : memref<1x128xf32, #tpu.memory_space<vmem>> -> memref<128xf32, #tpu.memory_space<vmem>>
    %c0_i32_166 = arith.constant 0 : i32
    %319 = tpu.memref_slice %arg4[%301, %c0_i32_166] : memref<16x128xf32, #tpu.memory_space<vmem>> -> memref<1x128xf32, #tpu.memory_space<vmem>>
    %320 = tpu.memref_squeeze %319 : memref<1x128xf32, #tpu.memory_space<vmem>> -> memref<128xf32, #tpu.memory_space<vmem>>
    %321 = tpu.memref_slice %arg5[%316] : memref<16x!tpu.dma_semaphore, #tpu.memory_space<semaphore_mem>> -> memref<1x!tpu.dma_semaphore, #tpu.memory_space<semaphore_mem>>
    %322 = tpu.memref_squeeze %321 : memref<1x!tpu.dma_semaphore, #tpu.memory_space<semaphore_mem>> -> memref<!tpu.dma_semaphore, #tpu.memory_space<semaphore_mem>>
    tpu.enqueue_dma source(%318 : memref<128xf32, #tpu.memory_space<vmem>>) target(%320 : memref<128xf32, #tpu.memory_space<vmem>>) target_semaphore(%322 : memref<!tpu.dma_semaphore, #tpu.memory_space<semaphore_mem>>)
    %c14_i32 = arith.constant 14 : i32
    %c1_i32_167 = arith.constant 1 : i32
    %323 = arith.muli %c14_i32, %c1_i32_167 : i32
    %c0_i32_168 = arith.constant 0 : i32
    %324 = arith.addi %c0_i32_168, %323 : i32
    %325 = arith.addi %0, %324 : i32
    %326 = arith.index_cast %325 : i32 to index
    %327 = memref.load %arg1[%326] : memref<16xi32, #tpu.memory_space<smem>>
    %c0_i32_169 = arith.constant 0 : i32
    %c63_i32_170 = arith.constant 63 : i32
    %328 = arith.maxsi %c0_i32_169, %327 : i32
    %329 = arith.minsi %c63_i32_170, %328 : i32
    %c16_i32_171 = arith.constant 16 : i32
    %c0_i32_172 = arith.constant 0 : i32
    %330 = arith.cmpi eq, %c16_i32_171, %c0_i32_172 : i32
    %c1_i32_173 = arith.constant 1 : i32
    %331 = arith.select %330, %c1_i32_173, %c16_i32_171 : i32
    %332 = arith.remsi %324, %331 : i32
    %c0_i32_174 = arith.constant 0 : i32
    %333 = arith.cmpi ne, %332, %c0_i32_174 : i32
    %c0_i32_175 = arith.constant 0 : i32
    %334 = arith.cmpi slt, %332, %c0_i32_175 : i32
    %c0_i32_176 = arith.constant 0 : i32
    %335 = arith.cmpi slt, %331, %c0_i32_176 : i32
    %336 = arith.xori %334, %335 : i1
    %337 = arith.andi %336, %333 : i1
    %338 = arith.addi %332, %331 : i32
    %339 = arith.select %337, %338, %332 : i32
    %c0_i32_177 = arith.constant 0 : i32
    %340 = tpu.memref_slice %arg2[%329, %c0_i32_177] : memref<64x128xf32, #tpu.memory_space<vmem>> -> memref<1x128xf32, #tpu.memory_space<vmem>>
    %341 = tpu.memref_squeeze %340 : memref<1x128xf32, #tpu.memory_space<vmem>> -> memref<128xf32, #tpu.memory_space<vmem>>
    %c0_i32_178 = arith.constant 0 : i32
    %342 = tpu.memref_slice %arg4[%324, %c0_i32_178] : memref<16x128xf32, #tpu.memory_space<vmem>> -> memref<1x128xf32, #tpu.memory_space<vmem>>
    %343 = tpu.memref_squeeze %342 : memref<1x128xf32, #tpu.memory_space<vmem>> -> memref<128xf32, #tpu.memory_space<vmem>>
    %344 = tpu.memref_slice %arg5[%339] : memref<16x!tpu.dma_semaphore, #tpu.memory_space<semaphore_mem>> -> memref<1x!tpu.dma_semaphore, #tpu.memory_space<semaphore_mem>>
    %345 = tpu.memref_squeeze %344 : memref<1x!tpu.dma_semaphore, #tpu.memory_space<semaphore_mem>> -> memref<!tpu.dma_semaphore, #tpu.memory_space<semaphore_mem>>
    tpu.enqueue_dma source(%341 : memref<128xf32, #tpu.memory_space<vmem>>) target(%343 : memref<128xf32, #tpu.memory_space<vmem>>) target_semaphore(%345 : memref<!tpu.dma_semaphore, #tpu.memory_space<semaphore_mem>>)
    %c15_i32 = arith.constant 15 : i32
    %c1_i32_179 = arith.constant 1 : i32
    %346 = arith.muli %c15_i32, %c1_i32_179 : i32
    %c0_i32_180 = arith.constant 0 : i32
    %347 = arith.addi %c0_i32_180, %346 : i32
    %348 = arith.addi %0, %347 : i32
    %349 = arith.index_cast %348 : i32 to index
    %350 = memref.load %arg1[%349] : memref<16xi32, #tpu.memory_space<smem>>
    %c0_i32_181 = arith.constant 0 : i32
    %c63_i32_182 = arith.constant 63 : i32
    %351 = arith.maxsi %c0_i32_181, %350 : i32
    %352 = arith.minsi %c63_i32_182, %351 : i32
    %c16_i32_183 = arith.constant 16 : i32
    %c0_i32_184 = arith.constant 0 : i32
    %353 = arith.cmpi eq, %c16_i32_183, %c0_i32_184 : i32
    %c1_i32_185 = arith.constant 1 : i32
    %354 = arith.select %353, %c1_i32_185, %c16_i32_183 : i32
    %355 = arith.remsi %347, %354 : i32
    %c0_i32_186 = arith.constant 0 : i32
    %356 = arith.cmpi ne, %355, %c0_i32_186 : i32
    %c0_i32_187 = arith.constant 0 : i32
    %357 = arith.cmpi slt, %355, %c0_i32_187 : i32
    %c0_i32_188 = arith.constant 0 : i32
    %358 = arith.cmpi slt, %354, %c0_i32_188 : i32
    %359 = arith.xori %357, %358 : i1
    %360 = arith.andi %359, %356 : i1
    %361 = arith.addi %355, %354 : i32
    %362 = arith.select %360, %361, %355 : i32
    %c0_i32_189 = arith.constant 0 : i32
    %363 = tpu.memref_slice %arg2[%352, %c0_i32_189] : memref<64x128xf32, #tpu.memory_space<vmem>> -> memref<1x128xf32, #tpu.memory_space<vmem>>
    %364 = tpu.memref_squeeze %363 : memref<1x128xf32, #tpu.memory_space<vmem>> -> memref<128xf32, #tpu.memory_space<vmem>>
    %c0_i32_190 = arith.constant 0 : i32
    %365 = tpu.memref_slice %arg4[%347, %c0_i32_190] : memref<16x128xf32, #tpu.memory_space<vmem>> -> memref<1x128xf32, #tpu.memory_space<vmem>>
    %366 = tpu.memref_squeeze %365 : memref<1x128xf32, #tpu.memory_space<vmem>> -> memref<128xf32, #tpu.memory_space<vmem>>
    %367 = tpu.memref_slice %arg5[%362] : memref<16x!tpu.dma_semaphore, #tpu.memory_space<semaphore_mem>> -> memref<1x!tpu.dma_semaphore, #tpu.memory_space<semaphore_mem>>
    %368 = tpu.memref_squeeze %367 : memref<1x!tpu.dma_semaphore, #tpu.memory_space<semaphore_mem>> -> memref<!tpu.dma_semaphore, #tpu.memory_space<semaphore_mem>>
    tpu.enqueue_dma source(%364 : memref<128xf32, #tpu.memory_space<vmem>>) target(%366 : memref<128xf32, #tpu.memory_space<vmem>>) target_semaphore(%368 : memref<!tpu.dma_semaphore, #tpu.memory_space<semaphore_mem>>)
    %c16_i32_191 = arith.constant 16 : i32
    %c0_i32_192 = arith.constant 0 : i32
    %c16_i32_193 = arith.constant 16 : i32
    %369 = arith.addi %c0_i32_192, %c16_i32_193 : i32
    %c1_i32_194 = arith.constant 1 : i32
    scf.for %arg6 = %c0_i32_192 to %369 step %c1_i32_194  : i32 {
      %c1_i32_199 = arith.constant 1 : i32
      %374 = arith.muli %arg6, %c1_i32_199 : i32
      %c0_i32_200 = arith.constant 0 : i32
      %375 = arith.addi %c0_i32_200, %374 : i32
      %c16_i32_201 = arith.constant 16 : i32
      %c0_i32_202 = arith.constant 0 : i32
      %376 = arith.cmpi eq, %c16_i32_201, %c0_i32_202 : i32
      %c1_i32_203 = arith.constant 1 : i32
      %377 = arith.select %376, %c1_i32_203, %c16_i32_201 : i32
      %378 = arith.remsi %375, %377 : i32
      %c0_i32_204 = arith.constant 0 : i32
      %379 = arith.cmpi ne, %378, %c0_i32_204 : i32
      %c0_i32_205 = arith.constant 0 : i32
      %380 = arith.cmpi slt, %378, %c0_i32_205 : i32
      %c0_i32_206 = arith.constant 0 : i32
      %381 = arith.cmpi slt, %377, %c0_i32_206 : i32
      %382 = arith.xori %380, %381 : i1
      %383 = arith.andi %382, %379 : i1
      %384 = arith.addi %378, %377 : i32
      %385 = arith.select %383, %384, %378 : i32
      %c0_i32_207 = arith.constant 0 : i32
      %c0_i32_208 = arith.constant 0 : i32
      %386 = tpu.memref_slice %arg2[%c0_i32_207, %c0_i32_208] : memref<64x128xf32, #tpu.memory_space<vmem>> -> memref<1x128xf32, #tpu.memory_space<vmem>>
      %387 = tpu.memref_squeeze %386 : memref<1x128xf32, #tpu.memory_space<vmem>> -> memref<128xf32, #tpu.memory_space<vmem>>
      %c0_i32_209 = arith.constant 0 : i32
      %388 = tpu.memref_slice %arg4[%375, %c0_i32_209] : memref<16x128xf32, #tpu.memory_space<vmem>> -> memref<1x128xf32, #tpu.memory_space<vmem>>
      %389 = tpu.memref_squeeze %388 : memref<1x128xf32, #tpu.memory_space<vmem>> -> memref<128xf32, #tpu.memory_space<vmem>>
      %390 = tpu.memref_slice %arg5[%385] : memref<16x!tpu.dma_semaphore, #tpu.memory_space<semaphore_mem>> -> memref<1x!tpu.dma_semaphore, #tpu.memory_space<semaphore_mem>>
      %391 = tpu.memref_squeeze %390 : memref<1x!tpu.dma_semaphore, #tpu.memory_space<semaphore_mem>> -> memref<!tpu.dma_semaphore, #tpu.memory_space<semaphore_mem>>
      tpu.wait_dma2 semaphore(%391 : memref<!tpu.dma_semaphore, #tpu.memory_space<semaphore_mem>>) src(%387 : memref<128xf32, #tpu.memory_space<vmem>>) dst(%389 : memref<128xf32, #tpu.memory_space<vmem>>)
      %c16_i32_210 = arith.constant 16 : i32
      %392 = arith.addi %375, %c16_i32_210 : i32
      %c16_i32_211 = arith.constant 16 : i32
      %393 = arith.cmpi slt, %392, %c16_i32_211 : i32
      %394 = arith.extui %393 : i1 to i32
      %c0_i32_212 = arith.constant 0 : i32
      %395 = arith.cmpi ne, %394, %c0_i32_212 : i32
      scf.if %395 {
        %c16_i32_213 = arith.constant 16 : i32
        %396 = arith.addi %375, %c16_i32_213 : i32
        %397 = arith.addi %0, %396 : i32
        %398 = arith.index_cast %397 : i32 to index
        %399 = memref.load %arg1[%398] : memref<16xi32, #tpu.memory_space<smem>>
        %c0_i32_214 = arith.constant 0 : i32
        %c63_i32_215 = arith.constant 63 : i32
        %400 = arith.maxsi %c0_i32_214, %399 : i32
        %401 = arith.minsi %c63_i32_215, %400 : i32
        %c16_i32_216 = arith.constant 16 : i32
        %c0_i32_217 = arith.constant 0 : i32
        %402 = arith.cmpi eq, %c16_i32_216, %c0_i32_217 : i32
        %c1_i32_218 = arith.constant 1 : i32
        %403 = arith.select %402, %c1_i32_218, %c16_i32_216 : i32
        %404 = arith.remsi %396, %403 : i32
        %c0_i32_219 = arith.constant 0 : i32
        %405 = arith.cmpi ne, %404, %c0_i32_219 : i32
        %c0_i32_220 = arith.constant 0 : i32
        %406 = arith.cmpi slt, %404, %c0_i32_220 : i32
        %c0_i32_221 = arith.constant 0 : i32
        %407 = arith.cmpi slt, %403, %c0_i32_221 : i32
        %408 = arith.xori %406, %407 : i1
        %409 = arith.andi %408, %405 : i1
        %410 = arith.addi %404, %403 : i32
        %411 = arith.select %409, %410, %404 : i32
        %c0_i32_222 = arith.constant 0 : i32
        %412 = tpu.memref_slice %arg2[%401, %c0_i32_222] : memref<64x128xf32, #tpu.memory_space<vmem>> -> memref<1x128xf32, #tpu.memory_space<vmem>>
        %413 = tpu.memref_squeeze %412 : memref<1x128xf32, #tpu.memory_space<vmem>> -> memref<128xf32, #tpu.memory_space<vmem>>
        %c0_i32_223 = arith.constant 0 : i32
        %414 = tpu.memref_slice %arg4[%396, %c0_i32_223] : memref<16x128xf32, #tpu.memory_space<vmem>> -> memref<1x128xf32, #tpu.memory_space<vmem>>
        %415 = tpu.memref_squeeze %414 : memref<1x128xf32, #tpu.memory_space<vmem>> -> memref<128xf32, #tpu.memory_space<vmem>>
        %416 = tpu.memref_slice %arg5[%411] : memref<16x!tpu.dma_semaphore, #tpu.memory_space<semaphore_mem>> -> memref<1x!tpu.dma_semaphore, #tpu.memory_space<semaphore_mem>>
        %417 = tpu.memref_squeeze %416 : memref<1x!tpu.dma_semaphore, #tpu.memory_space<semaphore_mem>> -> memref<!tpu.dma_semaphore, #tpu.memory_space<semaphore_mem>>
        tpu.enqueue_dma source(%413 : memref<128xf32, #tpu.memory_space<vmem>>) target(%415 : memref<128xf32, #tpu.memory_space<vmem>>) target_semaphore(%417 : memref<!tpu.dma_semaphore, #tpu.memory_space<semaphore_mem>>)
      } else {
      }
    }
    %c16_i32_195 = arith.constant 16 : i32
    %c0 = arith.constant 0 : index
    %c0_196 = arith.constant 0 : index
    %370 = vector.load %arg4[%c0, %c0_196] : memref<16x128xf32, #tpu.memory_space<vmem>>, vector<16x128xf32>
    %cst = arith.constant 11.3137083 : f32
    %371 = vector.broadcast %cst : f32 to vector<16x128xf32>
    %372 = arith.mulf %370, %371 : vector<16x128xf32>
    %c0_197 = arith.constant 0 : index
    %c0_198 = arith.constant 0 : index
    %373 = vector.load %arg3[%c0_197, %c0_198] : memref<16x128xf32, #tpu.memory_space<vmem>>, vector<16x128xf32>
    tpu.vector_store %arg3[%c0_197, %c0_198], %372 {strides = array<i32>} : memref<16x128xf32, #tpu.memory_space<vmem>>, vector<16x128xf32>,
    return
  }
  func.func @transform_0(%arg0: i32, %arg1: memref<16xi32, #tpu.memory_space<smem>>) -> (i32, i32) {
    %c0_i32 = arith.constant 0 : i32
    %c0_i32_0 = arith.constant 0 : i32
    %c0_i32_1 = arith.constant 0 : i32
    return %c0_i32, %c0_i32_0 : i32, i32
  }
  func.func @transform_1(%arg0: i32, %arg1: memref<16xi32, #tpu.memory_space<smem>>) -> (i32, i32) {
    %c0_i32 = arith.constant 0 : i32
    %c0_i32_0 = arith.constant 0 : i32
    return %arg0, %c0_i32 : i32, i32
  }
}

</mosaic_0001>

<llo_original>
// kernel: tpu_custom_call.1
$region0: #{tpu_custom_call.1}
  #allocation0 [shape = 'u32[]', space=smem, size = 0x4, offset = 0x4, fixed_abs, tag = 'smem constant byte address 0x4 - core index']
  #allocation1 [shape = 'u32[144,128]{1,0:T(1,128)}', space=vmem, size = 0x12000, scoped, tag = 'internal scratch']
  #allocation2 [shape = 'f32[16,128]{1,0:T(8,128)}', space=vmem, size = 0x2000, scoped, tag = 'scratch operand']
  #allocation3 [shape = 's32[16]{0}', space=sflag, size = 0x40, scoped, tag = 'scratch operand']
  #allocation4 [shape = 's32[1]{0}', space=sflag, size = 0x4, scoped, tag = 'scoped memory for tpu_custom_call.1']
  #allocation5 [shape = 'u8[512]{0}', space=smem, size = 0x200, scoped, tag = 'prefetched SMEM operand 0']
  #allocation10 [shape = 's32[]', space=sflag, size = 0x4, offset = 0, fixed_abs, tag = 'sflag constant byte address 0x0 - dummy sync flag']
  #allocation11 [shape = 's32[]', space=sflag, size = 0x4, offset = 0, fixed_abs, tag = 'sflag constant byte address 0x0 - dummy sync flag']
  #allocation12 [shape = 's32[]', space=sflag, size = 0x4, offset = 0, fixed_abs, tag = 'sflag constant byte address 0x0 - dummy sync flag']
  #allocation13 [shape = 's32[]', space=sflag, size = 0x4, offset = 0, fixed_abs, tag = 'sflag constant byte address 0x0 - dummy sync flag']
  #allocation14 [shape = 's32[]', space=sflag, size = 0x4, offset = 0, fixed_abs, tag = 'sflag constant byte address 0x0 - dummy sync flag']
  #allocation15 [shape = 's32[]', space=sflag, size = 0x4, offset = 0, fixed_abs, tag = 'sflag constant byte address 0x0 - dummy sync flag']
  #allocation16 [shape = 's32[]', space=sflag, size = 0x4, offset = 0, fixed_abs, tag = 'sflag constant byte address 0x0 - dummy sync flag']
  #allocation17 [shape = 's32[]', space=sflag, size = 0x4, offset = 0, fixed_abs, tag = 'sflag constant byte address 0x0 - dummy sync flag']
  #allocation18 [shape = 's32[]', space=sflag, size = 0x4, offset = 0, fixed_abs, tag = 'sflag constant byte address 0x0 - dummy sync flag']
  #allocation19 [shape = 's32[]', space=sflag, size = 0x4, offset = 0, fixed_abs, tag = 'sflag constant byte address 0x0 - dummy sync flag']
  #allocation20 [shape = 's32[]', space=sflag, size = 0x4, offset = 0, fixed_abs, tag = 'sflag constant byte address 0x0 - dummy sync flag']
  #allocation21 [shape = 's32[]', space=sflag, size = 0x4, offset = 0, fixed_abs, tag = 'sflag constant byte address 0x0 - dummy sync flag']
  #allocation22 [shape = 's32[]', space=sflag, size = 0x4, offset = 0, fixed_abs, tag = 'sflag constant byte address 0x0 - dummy sync flag']
  #allocation23 [shape = 's32[]', space=sflag, size = 0x4, offset = 0, fixed_abs, tag = 'sflag constant byte address 0x0 - dummy sync flag']
  #allocation24 [shape = 's32[]', space=sflag, size = 0x4, offset = 0, fixed_abs, tag = 'sflag constant byte address 0x0 - dummy sync flag']
  #allocation25 [shape = 's32[]', space=sflag, size = 0x4, offset = 0, fixed_abs, tag = 'sflag constant byte address 0x0 - dummy sync flag']
  #allocation26 [shape = 's32[]', space=sflag, size = 0x4, offset = 0, fixed_abs, tag = 'sflag constant byte address 0x0 - dummy sync flag']
  %s0 = inlined_call_operand.hbm [shape: s32[16], index: 0, kind: input, shape index: {}]
  %s1 = inlined_call_operand.hbm [shape: f32[64,128], index: 1, kind: input, shape index: {}]
  %s2 = inlined_call_operand.hbm [shape: f32[16,128], index: 2, kind: output, shape index: {}]
  %s3 = sld [smem:[#allocation0]]
  $region539: #{tpu_custom_call.1} parent=0
    _
  %s5 = ssub.s32 1, %s3
  %s6 = scalar_select 0, %s5, %s3
  %8 = dma.hbm_to_smem %s0, 16, [#allocation5], [#allocation4]
  %9 = dma.done [#allocation4], 16
  %10 = sfence
  $region1: #{tpu_custom_call.1} parent=0
    #allocation6 [shape = 'u8[32768]{0}', space=vmem, size = 0x8000, scoped, tag = 'input window, operand 1, single buffered']
    #allocation7 [shape = 's32[1]{0}', space=sflag, size = 0x4, scoped, tag = 'scoped memory for tpu_custom_call.1']
    #allocation8 [shape = 's32[1]{0}', space=sflag, size = 0x4, scoped, tag = 'scoped memory for tpu_custom_call.1']
    #allocation9 [shape = 'u8[8192]{0}', space=vmem, size = 0x2000, scoped, tag = 'output window, operand 0, single buffered']
    %11 = vsyncpa [#allocation7], 0
    %12 = vsyncpa [#allocation8], 0
    // Predicated region
    $region2: #{tpu_custom_call.1} parent=1 // pred_check
      _
    $region3: #{tpu_custom_call.1} parent=1 // pred_check_branch
      %14 = sbr.rel (0) target = $region5
    $region4: #{tpu_custom_call.1} parent=1 // pred_region
      %s16 = ssub.s32 1024, 1024
      %17 = vsyncadd [#allocation7], %s16
      %s18 = sshll.u32 [#allocation6], 4
      %s19 = int_to_ptr.vmem [resolvable:$true] %s18
      %24 = dma.hbm_to_vmem [thread:$0]  %s1, 1024, %s19, [#allocation7], 128, 128, 8
    $region5: #{tpu_custom_call.1} parent=1 // pred_fallthru
      _
    // Predicated region
    $region6: #{tpu_custom_call.1} parent=1 // pred_check
      _
    $region7: #{tpu_custom_call.1} parent=1 // pred_check_branch
      %26 = sbr.rel (0) target = $region9
    $region8: #{tpu_custom_call.1} parent=1 // pred_region
      %27 = dma.done [#allocation7], 1024
    $region9: #{tpu_custom_call.1} parent=1 // pred_fallthru
      _
    %s28 = smul.u32 0, 16
    %s29 = sld [smem:[#allocation5 + %s28]]
    %p30 = scmp.gt.s32.totalorder %s29, 0
    %s31 = scalar_select %p30, %s29, 0
    %p32 = scmp.lt.s32.totalorder %s31, 63
    %s33 = scalar_select %p32, %s31, 63
    %s34 = scalar_lea.vmem [#allocation6], %s33
    %p36 = scmp.lt.u32.totalorder 1, 8
    %p37 = pneg %p36
    // Predicated region
    $region10: #{tpu_custom_call.1} parent=1 // pred_check
      _
    $region11: #{tpu_custom_call.1} parent=1 // pred_check_branch
      %39 = sbr.rel (%p36) target = $region13
    $region12: #{tpu_custom_call.1} parent=1 // pred_region
      %s54 = sand.u32 1, 7
      %p55 = scmp.eq.s32.totalorder %s54, 0
      %p56 = pneg %p55
      // Predicated region
      $region25: #{tpu_custom_call.1} parent=12 // pred_check
        _
      $region26: #{tpu_custom_call.1} parent=12 // pred_check_branch
        %58 = sbr.rel (%p55) target = $region28
      $region27: #{tpu_custom_call.1} parent=12 // pred_region
        %s59 = sand.u32 1, 7
        %s60 = ssub.s32 1, %s59
        %s61 = scalar_lea.vmem %s34, %s60 [#allocation6]
        %s62 = ssub.s32 1, %s59
        %s63 = scalar_lea.vmem [#allocation2], %s62
        %s64 = sshllo.u32 0, %s59
        loop: start=0, step=1, limit=1
        $region29: #{tpu_custom_call.1} parent=27 // loop_pre_header
          _
        $region30: #{tpu_custom_call.1} parent=27 // loop_header
          %s66 = sphi 0, %s70
          %p67 = scmp.ge.s32.totalorder %s66, 1
          %s71 = sphi %s61, %s61
          %s72 = sphi %s63, %s63
        $region31: #{tpu_custom_call.1} parent=27 // loop_header_branch
          %69 = sbr.rel (%p67) target = $region35
        $region32: #{tpu_custom_call.1} parent=27 // loop_body
          %v73 = vld [vmem:[%s71] sm:%s64]
          %74 = vst [vmem:[%s72] sm:%s64] %v73
        $region33: #{tpu_custom_call.1} parent=27 // loop_footer
          %s70 = sadd.s32 1, %s66
        $region34: #{tpu_custom_call.1} parent=27 // loop_footer_branch
          %65 = sbr.rel target = $region30
        $region35: #{tpu_custom_call.1} parent=27 // loop_exit
          _
      $region28: #{tpu_custom_call.1} parent=12 // pred_fallthru
        _
    $region13: #{tpu_custom_call.1} parent=1 // pred_fallthru
      _
    // Predicated region
    $region14: #{tpu_custom_call.1} parent=1 // pred_check
      %p40 = pneg %p36
    $region15: #{tpu_custom_call.1} parent=1 // pred_check_branch
      %42 = sbr.rel (%p40) target = $region17
    $region16: #{tpu_custom_call.1} parent=1 // pred_region
      %s43 = sshllo.u32 0, 1
      loop: start=0, step=1, limit=1
      $region18: #{tpu_custom_call.1} parent=16 // loop_pre_header
        _
      $region19: #{tpu_custom_call.1} parent=16 // loop_header
        %s45 = sphi 0, %s49
        %p46 = scmp.ge.s32.totalorder %s45, 1
        %s50 = sphi %s34, %s34
        %s51 = sphi [#allocation2], [#allocation2]
      $region20: #{tpu_custom_call.1} parent=16 // loop_header_branch
        %48 = sbr.rel (%p46) target = $region24
      $region21: #{tpu_custom_call.1} parent=16 // loop_body
        %v52 = vld [vmem:[%s50] sm:%s43]
        %53 = vst [vmem:[%s51] sm:%s43] %v52
      $region22: #{tpu_custom_call.1} parent=16 // loop_footer
        %s49 = sadd.s32 1, %s45
      $region23: #{tpu_custom_call.1} parent=16 // loop_footer_branch
        %44 = sbr.rel target = $region19
      $region24: #{tpu_custom_call.1} parent=16 // loop_exit
        _
    $region17: #{tpu_custom_call.1} parent=1 // pred_fallthru
      _
    // Predicated region
    $region36: #{tpu_custom_call.1} parent=1 // pred_check
      _
    $region37: #{tpu_custom_call.1} parent=1 // pred_check_branch
      %77 = sbr.rel (0) target = $region39
    $region38: #{tpu_custom_call.1} parent=1 // pred_region
      %78 = vsyncadd [#allocation3], 16
    $region39: #{tpu_custom_call.1} parent=1 // pred_fallthru
      _
    %s79 = sadd.s32 %s28, 1
    %s80 = sld [smem:[#allocation5 + %s79]]
    %p81 = scmp.gt.s32.totalorder %s80, 0
    %s82 = scalar_select %p81, %s80, 0
    %p83 = scmp.lt.s32.totalorder %s82, 63
    %s84 = scalar_select %p83, %s82, 63
    %s85 = scalar_lea.vmem [#allocation6], %s84
    %s86 = scalar_lea.vmem [#allocation2], 1
    %s87 = scalar_lea.sflag [#allocation3], 1
    %p89 = scmp.lt.u32.totalorder 1, 8
    %p90 = pneg %p89
    // Predicated region
    $region40: #{tpu_custom_call.1} parent=1 // pred_check
      _
    $region41: #{tpu_custom_call.1} parent=1 // pred_check_branch
      %92 = sbr.rel (%p89) target = $region43
    $region42: #{tpu_custom_call.1} parent=1 // pred_region
      %s107 = sand.u32 1, 7
      %p108 = scmp.eq.s32.totalorder %s107, 0
      %p109 = pneg %p108
      // Predicated region
      $region55: #{tpu_custom_call.1} parent=42 // pred_check
        _
      $region56: #{tpu_custom_call.1} parent=42 // pred_check_branch
        %111 = sbr.rel (%p108) target = $region58
      $region57: #{tpu_custom_call.1} parent=42 // pred_region
        %s112 = sand.u32 1, 7
        %s113 = ssub.s32 1, %s112
        %s114 = scalar_lea.vmem %s85, %s113 [#allocation6]
        %s115 = ssub.s32 1, %s112
        %s116 = scalar_lea.vmem %s86, %s115 [#allocation2]
        %s117 = sshllo.u32 0, %s112
        loop: start=0, step=1, limit=1
        $region59: #{tpu_custom_call.1} parent=57 // loop_pre_header
          _
        $region60: #{tpu_custom_call.1} parent=57 // loop_header
          %s119 = sphi 0, %s123
          %p120 = scmp.ge.s32.totalorder %s119, 1
          %s124 = sphi %s114, %s114
          %s125 = sphi %s116, %s116
        $region61: #{tpu_custom_call.1} parent=57 // loop_header_branch
          %122 = sbr.rel (%p120) target = $region65
        $region62: #{tpu_custom_call.1} parent=57 // loop_body
          %v126 = vld [vmem:[%s124] sm:%s117]
          %127 = vst [vmem:[%s125] sm:%s117] %v126
        $region63: #{tpu_custom_call.1} parent=57 // loop_footer
          %s123 = sadd.s32 1, %s119
        $region64: #{tpu_custom_call.1} parent=57 // loop_footer_branch
          %118 = sbr.rel target = $region60
        $region65: #{tpu_custom_call.1} parent=57 // loop_exit
          _
      $region58: #{tpu_custom_call.1} parent=42 // pred_fallthru
        _
    $region43: #{tpu_custom_call.1} parent=1 // pred_fallthru
      _
    // Predicated region
    $region44: #{tpu_custom_call.1} parent=1 // pred_check
      %p93 = pneg %p89
    $region45: #{tpu_custom_call.1} parent=1 // pred_check_branch
      %95 = sbr.rel (%p93) target = $region47
    $region46: #{tpu_custom_call.1} parent=1 // pred_region
      %s96 = sshllo.u32 0, 1
      loop: start=0, step=1, limit=1
      $region48: #{tpu_custom_call.1} parent=46 // loop_pre_header
        _
      $region49: #{tpu_custom_call.1} parent=46 // loop_header
        %s98 = sphi 0, %s102
        %p99 = scmp.ge.s32.totalorder %s98, 1
        %s103 = sphi %s85, %s85
        %s104 = sphi %s86, %s86
      $region50: #{tpu_custom_call.1} parent=46 // loop_header_branch
        %101 = sbr.rel (%p99) target = $region54
      $region51: #{tpu_custom_call.1} parent=46 // loop_body
        %v105 = vld [vmem:[%s103] sm:%s96]
        %106 = vst [vmem:[%s104] sm:%s96] %v105
      $region52: #{tpu_custom_call.1} parent=46 // loop_footer
        %s102 = sadd.s32 1, %s98
      $region53: #{tpu_custom_call.1} parent=46 // loop_footer_branch
        %97 = sbr.rel target = $region49
      $region54: #{tpu_custom_call.1} parent=46 // loop_exit
        _
    $region47: #{tpu_custom_call.1} parent=1 // pred_fallthru
      _
    // Predicated region
    $region66: #{tpu_custom_call.1} parent=1 // pred_check
      _
    $region67: #{tpu_custom_call.1} parent=1 // pred_check_branch
      %130 = sbr.rel (0) target = $region69
    $region68: #{tpu_custom_call.1} parent=1 // pred_region
      %131 = vsyncadd %s87, 16
    $region69: #{tpu_custom_call.1} parent=1 // pred_fallthru
      _
    %s132 = sadd.s32 %s28, 2
    %s133 = sld [smem:[#allocation5 + %s132]]
    %p134 = scmp.gt.s32.totalorder %s133, 0
    %s135 = scalar_select %p134, %s133, 0
    %p136 = scmp.lt.s32.totalorder %s135, 63
    %s137 = scalar_select %p136, %s135, 63
    %s138 = scalar_lea.vmem [#allocation6], %s137
    %s139 = scalar_lea.vmem [#allocation2], 2
    %s140 = scalar_lea.sflag [#allocation3], 2
    %p142 = scmp.lt.u32.totalorder 1, 8
    %p143 = pneg %p142
    // Predicated region
    $region70: #{tpu_custom_call.1} parent=1 // pred_check
      _
    $region71: #{tpu_custom_call.1} parent=1 // pred_check_branch
      %145 = sbr.rel (%p142) target = $region73
    $region72: #{tpu_custom_call.1} parent=1 // pred_region
      %s160 = sand.u32 1, 7
      %p161 = scmp.eq.s32.totalorder %s160, 0
      %p162 = pneg %p161
      // Predicated region
      $region85: #{tpu_custom_call.1} parent=72 // pred_check
        _
      $region86: #{tpu_custom_call.1} parent=72 // pred_check_branch
        %164 = sbr.rel (%p161) target = $region88
      $region87: #{tpu_custom_call.1} parent=72 // pred_region
        %s165 = sand.u32 1, 7
        %s166 = ssub.s32 1, %s165
        %s167 = scalar_lea.vmem %s138, %s166 [#allocation6]
        %s168 = ssub.s32 1, %s165
        %s169 = scalar_lea.vmem %s139, %s168 [#allocation2]
        %s170 = sshllo.u32 0, %s165
        loop: start=0, step=1, limit=1
        $region89: #{tpu_custom_call.1} parent=87 // loop_pre_header
          _
        $region90: #{tpu_custom_call.1} parent=87 // loop_header
          %s172 = sphi 0, %s176
          %p173 = scmp.ge.s32.totalorder %s172, 1
          %s177 = sphi %s167, %s167
          %s178 = sphi %s169, %s169
        $region91: #{tpu_custom_call.1} parent=87 // loop_header_branch
          %175 = sbr.rel (%p173) target = $region95
        $region92: #{tpu_custom_call.1} parent=87 // loop_body
          %v179 = vld [vmem:[%s177] sm:%s170]
          %180 = vst [vmem:[%s178] sm:%s170] %v179
        $region93: #{tpu_custom_call.1} parent=87 // loop_footer
          %s176 = sadd.s32 1, %s172
        $region94: #{tpu_custom_call.1} parent=87 // loop_footer_branch
          %171 = sbr.rel target = $region90
        $region95: #{tpu_custom_call.1} parent=87 // loop_exit
          _
      $region88: #{tpu_custom_call.1} parent=72 // pred_fallthru
        _
    $region73: #{tpu_custom_call.1} parent=1 // pred_fallthru
      _
    // Predicated region
    $region74: #{tpu_custom_call.1} parent=1 // pred_check
      %p146 = pneg %p142
    $region75: #{tpu_custom_call.1} parent=1 // pred_check_branch
      %148 = sbr.rel (%p146) target = $region77
    $region76: #{tpu_custom_call.1} parent=1 // pred_region
      %s149 = sshllo.u32 0, 1
      loop: start=0, step=1, limit=1
      $region78: #{tpu_custom_call.1} parent=76 // loop_pre_header
        _
      $region79: #{tpu_custom_call.1} parent=76 // loop_header
        %s151 = sphi 0, %s155
        %p152 = scmp.ge.s32.totalorder %s151, 1
        %s156 = sphi %s138, %s138
        %s157 = sphi %s139, %s139
      $region80: #{tpu_custom_call.1} parent=76 // loop_header_branch
        %154 = sbr.rel (%p152) target = $region84
      $region81: #{tpu_custom_call.1} parent=76 // loop_body
        %v158 = vld [vmem:[%s156] sm:%s149]
        %159 = vst [vmem:[%s157] sm:%s149] %v158
      $region82: #{tpu_custom_call.1} parent=76 // loop_footer
        %s155 = sadd.s32 1, %s151
      $region83: #{tpu_custom_call.1} parent=76 // loop_footer_branch
        %150 = sbr.rel target = $region79
      $region84: #{tpu_custom_call.1} parent=76 // loop_exit
        _
    $region77: #{tpu_custom_call.1} parent=1 // pred_fallthru
      _
    // Predicated region
    $region96: #{tpu_custom_call.1} parent=1 // pred_check
      _
    $region97: #{tpu_custom_call.1} parent=1 // pred_check_branch
      %183 = sbr.rel (0) target = $region99
    $region98: #{tpu_custom_call.1} parent=1 // pred_region
      %184 = vsyncadd %s140, 16
    $region99: #{tpu_custom_call.1} parent=1 // pred_fallthru
      _
    %s185 = sadd.s32 %s28, 3
    %s186 = sld [smem:[#allocation5 + %s185]]
    %p187 = scmp.gt.s32.totalorder %s186, 0
    %s188 = scalar_select %p187, %s186, 0
    %p189 = scmp.lt.s32.totalorder %s188, 63
    %s190 = scalar_select %p189, %s188, 63
    %s191 = scalar_lea.vmem [#allocation6], %s190
    %s192 = scalar_lea.vmem [#allocation2], 3
    %s193 = scalar_lea.sflag [#allocation3], 3
    %p195 = scmp.lt.u32.totalorder 1, 8
    %p196 = pneg %p195
    // Predicated region
    $region100: #{tpu_custom_call.1} parent=1 // pred_check
      _
    $region101: #{tpu_custom_call.1} parent=1 // pred_check_branch
      %198 = sbr.rel (%p195) target = $region103
    $region102: #{tpu_custom_call.1} parent=1 // pred_region
      %s213 = sand.u32 1, 7
      %p214 = scmp.eq.s32.totalorder %s213, 0
      %p215 = pneg %p214
      // Predicated region
      $region115: #{tpu_custom_call.1} parent=102 // pred_check
        _
      $region116: #{tpu_custom_call.1} parent=102 // pred_check_branch
        %217 = sbr.rel (%p214) target = $region118
      $region117: #{tpu_custom_call.1} parent=102 // pred_region
        %s218 = sand.u32 1, 7
        %s219 = ssub.s32 1, %s218
        %s220 = scalar_lea.vmem %s191, %s219 [#allocation6]
        %s221 = ssub.s32 1, %s218
        %s222 = scalar_lea.vmem %s192, %s221 [#allocation2]
        %s223 = sshllo.u32 0, %s218
        loop: start=0, step=1, limit=1
        $region119: #{tpu_custom_call.1} parent=117 // loop_pre_header
          _
        $region120: #{tpu_custom_call.1} parent=117 // loop_header
          %s225 = sphi 0, %s229
          %p226 = scmp.ge.s32.totalorder %s225, 1
          %s230 = sphi %s220, %s220
          %s231 = sphi %s222, %s222
        $region121: #{tpu_custom_call.1} parent=117 // loop_header_branch
          %228 = sbr.rel (%p226) target = $region125
        $region122: #{tpu_custom_call.1} parent=117 // loop_body
          %v232 = vld [vmem:[%s230] sm:%s223]
          %233 = vst [vmem:[%s231] sm:%s223] %v232
        $region123: #{tpu_custom_call.1} parent=117 // loop_footer
          %s229 = sadd.s32 1, %s225
        $region124: #{tpu_custom_call.1} parent=117 // loop_footer_branch
          %224 = sbr.rel target = $region120
        $region125: #{tpu_custom_call.1} parent=117 // loop_exit
          _
      $region118: #{tpu_custom_call.1} parent=102 // pred_fallthru
        _
    $region103: #{tpu_custom_call.1} parent=1 // pred_fallthru
      _
    // Predicated region
    $region104: #{tpu_custom_call.1} parent=1 // pred_check
      %p199 = pneg %p195
    $region105: #{tpu_custom_call.1} parent=1 // pred_check_branch
      %201 = sbr.rel (%p199) target = $region107
    $region106: #{tpu_custom_call.1} parent=1 // pred_region
      %s202 = sshllo.u32 0, 1
      loop: start=0, step=1, limit=1
      $region108: #{tpu_custom_call.1} parent=106 // loop_pre_header
        _
      $region109: #{tpu_custom_call.1} parent=106 // loop_header
        %s204 = sphi 0, %s208
        %p205 = scmp.ge.s32.totalorder %s204, 1
        %s209 = sphi %s191, %s191
        %s210 = sphi %s192, %s192
      $region110: #{tpu_custom_call.1} parent=106 // loop_header_branch
        %207 = sbr.rel (%p205) target = $region114
      $region111: #{tpu_custom_call.1} parent=106 // loop_body
        %v211 = vld [vmem:[%s209] sm:%s202]
        %212 = vst [vmem:[%s210] sm:%s202] %v211
      $region112: #{tpu_custom_call.1} parent=106 // loop_footer
        %s208 = sadd.s32 1, %s204
      $region113: #{tpu_custom_call.1} parent=106 // loop_footer_branch
        %203 = sbr.rel target = $region109
      $region114: #{tpu_custom_call.1} parent=106 // loop_exit
        _
    $region107: #{tpu_custom_call.1} parent=1 // pred_fallthru
      _
    // Predicated region
    $region126: #{tpu_custom_call.1} parent=1 // pred_check
      _
    $region127: #{tpu_custom_call.1} parent=1 // pred_check_branch
      %236 = sbr.rel (0) target = $region129
    $region128: #{tpu_custom_call.1} parent=1 // pred_region
      %237 = vsyncadd %s193, 16
    $region129: #{tpu_custom_call.1} parent=1 // pred_fallthru
      _
    %s238 = sadd.s32 %s28, 4
    %s239 = sld [smem:[#allocation5 + %s238]]
    %p240 = scmp.gt.s32.totalorder %s239, 0
    %s241 = scalar_select %p240, %s239, 0
    %p242 = scmp.lt.s32.totalorder %s241, 63
    %s243 = scalar_select %p242, %s241, 63
    %s244 = scalar_lea.vmem [#allocation6], %s243
    %s245 = scalar_lea.vmem [#allocation2], 4
    %s246 = scalar_lea.sflag [#allocation3], 4
    %p248 = scmp.lt.u32.totalorder 1, 8
    %p249 = pneg %p248
    // Predicated region
    $region130: #{tpu_custom_call.1} parent=1 // pred_check
      _
    $region131: #{tpu_custom_call.1} parent=1 // pred_check_branch
      %251 = sbr.rel (%p248) target = $region133
    $region132: #{tpu_custom_call.1} parent=1 // pred_region
      %s266 = sand.u32 1, 7
      %p267 = scmp.eq.s32.totalorder %s266, 0
      %p268 = pneg %p267
      // Predicated region
      $region145: #{tpu_custom_call.1} parent=132 // pred_check
        _
      $region146: #{tpu_custom_call.1} parent=132 // pred_check_branch
        %270 = sbr.rel (%p267) target = $region148
      $region147: #{tpu_custom_call.1} parent=132 // pred_region
        %s271 = sand.u32 1, 7
        %s272 = ssub.s32 1, %s271
        %s273 = scalar_lea.vmem %s244, %s272 [#allocation6]
        %s274 = ssub.s32 1, %s271
        %s275 = scalar_lea.vmem %s245, %s274 [#allocation2]
        %s276 = sshllo.u32 0, %s271
        loop: start=0, step=1, limit=1
        $region149: #{tpu_custom_call.1} parent=147 // loop_pre_header
          _
        $region150: #{tpu_custom_call.1} parent=147 // loop_header
          %s278 = sphi 0, %s282
          %p279 = scmp.ge.s32.totalorder %s278, 1
          %s283 = sphi %s273, %s273
          %s284 = sphi %s275, %s275
        $region151: #{tpu_custom_call.1} parent=147 // loop_header_branch
          %281 = sbr.rel (%p279) target = $region155
        $region152: #{tpu_custom_call.1} parent=147 // loop_body
          %v285 = vld [vmem:[%s283] sm:%s276]
          %286 = vst [vmem:[%s284] sm:%s276] %v285
        $region153: #{tpu_custom_call.1} parent=147 // loop_footer
          %s282 = sadd.s32 1, %s278
        $region154: #{tpu_custom_call.1} parent=147 // loop_footer_branch
          %277 = sbr.rel target = $region150
        $region155: #{tpu_custom_call.1} parent=147 // loop_exit
          _
      $region148: #{tpu_custom_call.1} parent=132 // pred_fallthru
        _
    $region133: #{tpu_custom_call.1} parent=1 // pred_fallthru
      _
    // Predicated region
    $region134: #{tpu_custom_call.1} parent=1 // pred_check
      %p252 = pneg %p248
    $region135: #{tpu_custom_call.1} parent=1 // pred_check_branch
      %254 = sbr.rel (%p252) target = $region137
    $region136: #{tpu_custom_call.1} parent=1 // pred_region
      %s255 = sshllo.u32 0, 1
      loop: start=0, step=1, limit=1
      $region138: #{tpu_custom_call.1} parent=136 // loop_pre_header
        _
      $region139: #{tpu_custom_call.1} parent=136 // loop_header
        %s257 = sphi 0, %s261
        %p258 = scmp.ge.s32.totalorder %s257, 1
        %s262 = sphi %s244, %s244
        %s263 = sphi %s245, %s245
      $region140: #{tpu_custom_call.1} parent=136 // loop_header_branch
        %260 = sbr.rel (%p258) target = $region144
      $region141: #{tpu_custom_call.1} parent=136 // loop_body
        %v264 = vld [vmem:[%s262] sm:%s255]
        %265 = vst [vmem:[%s263] sm:%s255] %v264
      $region142: #{tpu_custom_call.1} parent=136 // loop_footer
        %s261 = sadd.s32 1, %s257
      $region143: #{tpu_custom_call.1} parent=136 // loop_footer_branch
        %256 = sbr.rel target = $region139
      $region144: #{tpu_custom_call.1} parent=136 // loop_exit
        _
    $region137: #{tpu_custom_call.1} parent=1 // pred_fallthru
      _
    // Predicated region
    $region156: #{tpu_custom_call.1} parent=1 // pred_check
      _
    $region157: #{tpu_custom_call.1} parent=1 // pred_check_branch
      %289 = sbr.rel (0) target = $region159
    $region158: #{tpu_custom_call.1} parent=1 // pred_region
      %290 = vsyncadd %s246, 16
    $region159: #{tpu_custom_call.1} parent=1 // pred_fallthru
      _
    %s291 = sadd.s32 %s28, 5
    %s292 = sld [smem:[#allocation5 + %s291]]
    %p293 = scmp.gt.s32.totalorder %s292, 0
    %s294 = scalar_select %p293, %s292, 0
    %p295 = scmp.lt.s32.totalorder %s294, 63
    %s296 = scalar_select %p295, %s294, 63
    %s297 = scalar_lea.vmem [#allocation6], %s296
    %s298 = scalar_lea.vmem [#allocation2], 5
    %s299 = scalar_lea.sflag [#allocation3], 5
    %p301 = scmp.lt.u32.totalorder 1, 8
    %p302 = pneg %p301
    // Predicated region
    $region160: #{tpu_custom_call.1} parent=1 // pred_check
      _
    $region161: #{tpu_custom_call.1} parent=1 // pred_check_branch
      %304 = sbr.rel (%p301) target = $region163
    $region162: #{tpu_custom_call.1} parent=1 // pred_region
      %s319 = sand.u32 1, 7
      %p320 = scmp.eq.s32.totalorder %s319, 0
      %p321 = pneg %p320
      // Predicated region
      $region175: #{tpu_custom_call.1} parent=162 // pred_check
        _
      $region176: #{tpu_custom_call.1} parent=162 // pred_check_branch
        %323 = sbr.rel (%p320) target = $region178
      $region177: #{tpu_custom_call.1} parent=162 // pred_region
        %s324 = sand.u32 1, 7
        %s325 = ssub.s32 1, %s324
        %s326 = scalar_lea.vmem %s297, %s325 [#allocation6]
        %s327 = ssub.s32 1, %s324
        %s328 = scalar_lea.vmem %s298, %s327 [#allocation2]
        %s329 = sshllo.u32 0, %s324
        loop: start=0, step=1, limit=1
        $region179: #{tpu_custom_call.1} parent=177 // loop_pre_header
          _
        $region180: #{tpu_custom_call.1} parent=177 // loop_header
          %s331 = sphi 0, %s335
          %p332 = scmp.ge.s32.totalorder %s331, 1
          %s336 = sphi %s326, %s326
          %s337 = sphi %s328, %s328
        $region181: #{tpu_custom_call.1} parent=177 // loop_header_branch
          %334 = sbr.rel (%p332) target = $region185
        $region182: #{tpu_custom_call.1} parent=177 // loop_body
          %v338 = vld [vmem:[%s336] sm:%s329]
          %339 = vst [vmem:[%s337] sm:%s329] %v338
        $region183: #{tpu_custom_call.1} parent=177 // loop_footer
          %s335 = sadd.s32 1, %s331
        $region184: #{tpu_custom_call.1} parent=177 // loop_footer_branch
          %330 = sbr.rel target = $region180
        $region185: #{tpu_custom_call.1} parent=177 // loop_exit
          _
      $region178: #{tpu_custom_call.1} parent=162 // pred_fallthru
        _
    $region163: #{tpu_custom_call.1} parent=1 // pred_fallthru
      _
    // Predicated region
    $region164: #{tpu_custom_call.1} parent=1 // pred_check
      %p305 = pneg %p301
    $region165: #{tpu_custom_call.1} parent=1 // pred_check_branch
      %307 = sbr.rel (%p305) target = $region167
    $region166: #{tpu_custom_call.1} parent=1 // pred_region
      %s308 = sshllo.u32 0, 1
      loop: start=0, step=1, limit=1
      $region168: #{tpu_custom_call.1} parent=166 // loop_pre_header
        _
      $region169: #{tpu_custom_call.1} parent=166 // loop_header
        %s310 = sphi 0, %s314
        %p311 = scmp.ge.s32.totalorder %s310, 1
        %s315 = sphi %s297, %s297
        %s316 = sphi %s298, %s298
      $region170: #{tpu_custom_call.1} parent=166 // loop_header_branch
        %313 = sbr.rel (%p311) target = $region174
      $region171: #{tpu_custom_call.1} parent=166 // loop_body
        %v317 = vld [vmem:[%s315] sm:%s308]
        %318 = vst [vmem:[%s316] sm:%s308] %v317
      $region172: #{tpu_custom_call.1} parent=166 // loop_footer
        %s314 = sadd.s32 1, %s310
      $region173: #{tpu_custom_call.1} parent=166 // loop_footer_branch
        %309 = sbr.rel target = $region169
      $region174: #{tpu_custom_call.1} parent=166 // loop_exit
        _
    $region167: #{tpu_custom_call.1} parent=1 // pred_fallthru
      _
    // Predicated region
    $region186: #{tpu_custom_call.1} parent=1 // pred_check
      _
    $region187: #{tpu_custom_call.1} parent=1 // pred_check_branch
      %342 = sbr.rel (0) target = $region189
    $region188: #{tpu_custom_call.1} parent=1 // pred_region
      %343 = vsyncadd %s299, 16
    $region189: #{tpu_custom_call.1} parent=1 // pred_fallthru
      _
    %s344 = sadd.s32 %s28, 6
    %s345 = sld [smem:[#allocation5 + %s344]]
    %p346 = scmp.gt.s32.totalorder %s345, 0
    %s347 = scalar_select %p346, %s345, 0
    %p348 = scmp.lt.s32.totalorder %s347, 63
    %s349 = scalar_select %p348, %s347, 63
    %s350 = scalar_lea.vmem [#allocation6], %s349
    %s351 = scalar_lea.vmem [#allocation2], 6
    %s352 = scalar_lea.sflag [#allocation3], 6
    %p354 = scmp.lt.u32.totalorder 1, 8
    %p355 = pneg %p354
    // Predicated region
    $region190: #{tpu_custom_call.1} parent=1 // pred_check
      _
    $region191: #{tpu_custom_call.1} parent=1 // pred_check_branch
      %357 = sbr.rel (%p354) target = $region193
    $region192: #{tpu_custom_call.1} parent=1 // pred_region
      %s372 = sand.u32 1, 7
      %p373 = scmp.eq.s32.totalorder %s372, 0
      %p374 = pneg %p373
      // Predicated region
      $region205: #{tpu_custom_call.1} parent=192 // pred_check
        _
      $region206: #{tpu_custom_call.1} parent=192 // pred_check_branch
        %376 = sbr.rel (%p373) target = $region208
      $region207: #{tpu_custom_call.1} parent=192 // pred_region
        %s377 = sand.u32 1, 7
        %s378 = ssub.s32 1, %s377
        %s379 = scalar_lea.vmem %s350, %s378 [#allocation6]
        %s380 = ssub.s32 1, %s377
        %s381 = scalar_lea.vmem %s351, %s380 [#allocation2]
        %s382 = sshllo.u32 0, %s377
        loop: start=0, step=1, limit=1
        $region209: #{tpu_custom_call.1} parent=207 // loop_pre_header
          _
        $region210: #{tpu_custom_call.1} parent=207 // loop_header
          %s384 = sphi 0, %s388
          %p385 = scmp.ge.s32.totalorder %s384, 1
          %s389 = sphi %s379, %s379
          %s390 = sphi %s381, %s381
        $region211: #{tpu_custom_call.1} parent=207 // loop_header_branch
          %387 = sbr.rel (%p385) target = $region215
        $region212: #{tpu_custom_call.1} parent=207 // loop_body
          %v391 = vld [vmem:[%s389] sm:%s382]
          %392 = vst [vmem:[%s390] sm:%s382] %v391
        $region213: #{tpu_custom_call.1} parent=207 // loop_footer
          %s388 = sadd.s32 1, %s384
        $region214: #{tpu_custom_call.1} parent=207 // loop_footer_branch
          %383 = sbr.rel target = $region210
        $region215: #{tpu_custom_call.1} parent=207 // loop_exit
          _
      $region208: #{tpu_custom_call.1} parent=192 // pred_fallthru
        _
    $region193: #{tpu_custom_call.1} parent=1 // pred_fallthru
      _
    // Predicated region
    $region194: #{tpu_custom_call.1} parent=1 // pred_check
      %p358 = pneg %p354
    $region195: #{tpu_custom_call.1} parent=1 // pred_check_branch
      %360 = sbr.rel (%p358) target = $region197
    $region196: #{tpu_custom_call.1} parent=1 // pred_region
      %s361 = sshllo.u32 0, 1
      loop: start=0, step=1, limit=1
      $region198: #{tpu_custom_call.1} parent=196 // loop_pre_header
        _
      $region199: #{tpu_custom_call.1} parent=196 // loop_header
        %s363 = sphi 0, %s367
        %p364 = scmp.ge.s32.totalorder %s363, 1
        %s368 = sphi %s350, %s350
        %s369 = sphi %s351, %s351
      $region200: #{tpu_custom_call.1} parent=196 // loop_header_branch
        %366 = sbr.rel (%p364) target = $region204
      $region201: #{tpu_custom_call.1} parent=196 // loop_body
        %v370 = vld [vmem:[%s368] sm:%s361]
        %371 = vst [vmem:[%s369] sm:%s361] %v370
      $region202: #{tpu_custom_call.1} parent=196 // loop_footer
        %s367 = sadd.s32 1, %s363
      $region203: #{tpu_custom_call.1} parent=196 // loop_footer_branch
        %362 = sbr.rel target = $region199
      $region204: #{tpu_custom_call.1} parent=196 // loop_exit
        _
    $region197: #{tpu_custom_call.1} parent=1 // pred_fallthru
      _
    // Predicated region
    $region216: #{tpu_custom_call.1} parent=1 // pred_check
      _
    $region217: #{tpu_custom_call.1} parent=1 // pred_check_branch
      %395 = sbr.rel (0) target = $region219
    $region218: #{tpu_custom_call.1} parent=1 // pred_region
      %396 = vsyncadd %s352, 16
    $region219: #{tpu_custom_call.1} parent=1 // pred_fallthru
      _
    %s397 = sadd.s32 %s28, 7
    %s398 = sld [smem:[#allocation5 + %s397]]
    %p399 = scmp.gt.s32.totalorder %s398, 0
    %s400 = scalar_select %p399, %s398, 0
    %p401 = scmp.lt.s32.totalorder %s400, 63
    %s402 = scalar_select %p401, %s400, 63
    %s403 = scalar_lea.vmem [#allocation6], %s402
    %s404 = scalar_lea.vmem [#allocation2], 7
    %s405 = scalar_lea.sflag [#allocation3], 7
    %p407 = scmp.lt.u32.totalorder 1, 8
    %p408 = pneg %p407
    // Predicated region
    $region220: #{tpu_custom_call.1} parent=1 // pred_check
      _
    $region221: #{tpu_custom_call.1} parent=1 // pred_check_branch
      %410 = sbr.rel (%p407) target = $region223
    $region222: #{tpu_custom_call.1} parent=1 // pred_region
      %s425 = sand.u32 1, 7
      %p426 = scmp.eq.s32.totalorder %s425, 0
      %p427 = pneg %p426
      // Predicated region
      $region235: #{tpu_custom_call.1} parent=222 // pred_check
        _
      $region236: #{tpu_custom_call.1} parent=222 // pred_check_branch
        %429 = sbr.rel (%p426) target = $region238
      $region237: #{tpu_custom_call.1} parent=222 // pred_region
        %s430 = sand.u32 1, 7
        %s431 = ssub.s32 1, %s430
        %s432 = scalar_lea.vmem %s403, %s431 [#allocation6]
        %s433 = ssub.s32 1, %s430
        %s434 = scalar_lea.vmem %s404, %s433 [#allocation2]
        %s435 = sshllo.u32 0, %s430
        loop: start=0, step=1, limit=1
        $region239: #{tpu_custom_call.1} parent=237 // loop_pre_header
          _
        $region240: #{tpu_custom_call.1} parent=237 // loop_header
          %s437 = sphi 0, %s441
          %p438 = scmp.ge.s32.totalorder %s437, 1
          %s442 = sphi %s432, %s432
          %s443 = sphi %s434, %s434
        $region241: #{tpu_custom_call.1} parent=237 // loop_header_branch
          %440 = sbr.rel (%p438) target = $region245
        $region242: #{tpu_custom_call.1} parent=237 // loop_body
          %v444 = vld [vmem:[%s442] sm:%s435]
          %445 = vst [vmem:[%s443] sm:%s435] %v444
        $region243: #{tpu_custom_call.1} parent=237 // loop_footer
          %s441 = sadd.s32 1, %s437
        $region244: #{tpu_custom_call.1} parent=237 // loop_footer_branch
          %436 = sbr.rel target = $region240
        $region245: #{tpu_custom_call.1} parent=237 // loop_exit
          _
      $region238: #{tpu_custom_call.1} parent=222 // pred_fallthru
        _
    $region223: #{tpu_custom_call.1} parent=1 // pred_fallthru
      _
    // Predicated region
    $region224: #{tpu_custom_call.1} parent=1 // pred_check
      %p411 = pneg %p407
    $region225: #{tpu_custom_call.1} parent=1 // pred_check_branch
      %413 = sbr.rel (%p411) target = $region227
    $region226: #{tpu_custom_call.1} parent=1 // pred_region
      %s414 = sshllo.u32 0, 1
      loop: start=0, step=1, limit=1
      $region228: #{tpu_custom_call.1} parent=226 // loop_pre_header
        _
      $region229: #{tpu_custom_call.1} parent=226 // loop_header
        %s416 = sphi 0, %s420
        %p417 = scmp.ge.s32.totalorder %s416, 1
        %s421 = sphi %s403, %s403
        %s422 = sphi %s404, %s404
      $region230: #{tpu_custom_call.1} parent=226 // loop_header_branch
        %419 = sbr.rel (%p417) target = $region234
      $region231: #{tpu_custom_call.1} parent=226 // loop_body
        %v423 = vld [vmem:[%s421] sm:%s414]
        %424 = vst [vmem:[%s422] sm:%s414] %v423
      $region232: #{tpu_custom_call.1} parent=226 // loop_footer
        %s420 = sadd.s32 1, %s416
      $region233: #{tpu_custom_call.1} parent=226 // loop_footer_branch
        %415 = sbr.rel target = $region229
      $region234: #{tpu_custom_call.1} parent=226 // loop_exit
        _
    $region227: #{tpu_custom_call.1} parent=1 // pred_fallthru
      _
    // Predicated region
    $region246: #{tpu_custom_call.1} parent=1 // pred_check
      _
    $region247: #{tpu_custom_call.1} parent=1 // pred_check_branch
      %448 = sbr.rel (0) target = $region249
    $region248: #{tpu_custom_call.1} parent=1 // pred_region
      %449 = vsyncadd %s405, 16
    $region249: #{tpu_custom_call.1} parent=1 // pred_fallthru
      _
    %s450 = sadd.s32 %s28, 8
    %s451 = sld [smem:[#allocation5 + %s450]]
    %p452 = scmp.gt.s32.totalorder %s451, 0
    %s453 = scalar_select %p452, %s451, 0
    %p454 = scmp.lt.s32.totalorder %s453, 63
    %s455 = scalar_select %p454, %s453, 63
    %s456 = scalar_lea.vmem [#allocation6], %s455
    %s457 = scalar_lea.vmem [#allocation2], 8
    %s458 = scalar_lea.sflag [#allocation3], 8
    %p460 = scmp.lt.u32.totalorder 1, 8
    %p461 = pneg %p460
    // Predicated region
    $region250: #{tpu_custom_call.1} parent=1 // pred_check
      _
    $region251: #{tpu_custom_call.1} parent=1 // pred_check_branch
      %463 = sbr.rel (%p460) target = $region253
    $region252: #{tpu_custom_call.1} parent=1 // pred_region
      %s478 = sand.u32 1, 7
      %p479 = scmp.eq.s32.totalorder %s478, 0
      %p480 = pneg %p479
      // Predicated region
      $region265: #{tpu_custom_call.1} parent=252 // pred_check
        _
      $region266: #{tpu_custom_call.1} parent=252 // pred_check_branch
        %482 = sbr.rel (%p479) target = $region268
      $region267: #{tpu_custom_call.1} parent=252 // pred_region
        %s483 = sand.u32 1, 7
        %s484 = ssub.s32 1, %s483
        %s485 = scalar_lea.vmem %s456, %s484 [#allocation6]
        %s486 = ssub.s32 1, %s483
        %s487 = scalar_lea.vmem %s457, %s486 [#allocation2]
        %s488 = sshllo.u32 0, %s483
        loop: start=0, step=1, limit=1
        $region269: #{tpu_custom_call.1} parent=267 // loop_pre_header
          _
        $region270: #{tpu_custom_call.1} parent=267 // loop_header
          %s490 = sphi 0, %s494
          %p491 = scmp.ge.s32.totalorder %s490, 1
          %s495 = sphi %s485, %s485
          %s496 = sphi %s487, %s487
        $region271: #{tpu_custom_call.1} parent=267 // loop_header_branch
          %493 = sbr.rel (%p491) target = $region275
        $region272: #{tpu_custom_call.1} parent=267 // loop_body
          %v497 = vld [vmem:[%s495] sm:%s488]
          %498 = vst [vmem:[%s496] sm:%s488] %v497
        $region273: #{tpu_custom_call.1} parent=267 // loop_footer
          %s494 = sadd.s32 1, %s490
        $region274: #{tpu_custom_call.1} parent=267 // loop_footer_branch
          %489 = sbr.rel target = $region270
        $region275: #{tpu_custom_call.1} parent=267 // loop_exit
          _
      $region268: #{tpu_custom_call.1} parent=252 // pred_fallthru
        _
    $region253: #{tpu_custom_call.1} parent=1 // pred_fallthru
      _
    // Predicated region
    $region254: #{tpu_custom_call.1} parent=1 // pred_check
      %p464 = pneg %p460
    $region255: #{tpu_custom_call.1} parent=1 // pred_check_branch
      %466 = sbr.rel (%p464) target = $region257
    $region256: #{tpu_custom_call.1} parent=1 // pred_region
      %s467 = sshllo.u32 0, 1
      loop: start=0, step=1, limit=1
      $region258: #{tpu_custom_call.1} parent=256 // loop_pre_header
        _
      $region259: #{tpu_custom_call.1} parent=256 // loop_header
        %s469 = sphi 0, %s473
        %p470 = scmp.ge.s32.totalorder %s469, 1
        %s474 = sphi %s456, %s456
        %s475 = sphi %s457, %s457
      $region260: #{tpu_custom_call.1} parent=256 // loop_header_branch
        %472 = sbr.rel (%p470) target = $region264
      $region261: #{tpu_custom_call.1} parent=256 // loop_body
        %v476 = vld [vmem:[%s474] sm:%s467]
        %477 = vst [vmem:[%s475] sm:%s467] %v476
      $region262: #{tpu_custom_call.1} parent=256 // loop_footer
        %s473 = sadd.s32 1, %s469
      $region263: #{tpu_custom_call.1} parent=256 // loop_footer_branch
        %468 = sbr.rel target = $region259
      $region264: #{tpu_custom_call.1} parent=256 // loop_exit
        _
    $region257: #{tpu_custom_call.1} parent=1 // pred_fallthru
      _
    // Predicated region
    $region276: #{tpu_custom_call.1} parent=1 // pred_check
      _
    $region277: #{tpu_custom_call.1} parent=1 // pred_check_branch
      %501 = sbr.rel (0) target = $region279
    $region278: #{tpu_custom_call.1} parent=1 // pred_region
      %502 = vsyncadd %s458, 16
    $region279: #{tpu_custom_call.1} parent=1 // pred_fallthru
      _
    %s503 = sadd.s32 %s28, 9
    %s504 = sld [smem:[#allocation5 + %s503]]
    %p505 = scmp.gt.s32.totalorder %s504, 0
    %s506 = scalar_select %p505, %s504, 0
    %p507 = scmp.lt.s32.totalorder %s506, 63
    %s508 = scalar_select %p507, %s506, 63
    %s509 = scalar_lea.vmem [#allocation6], %s508
    %s510 = scalar_lea.vmem [#allocation2], 9
    %s511 = scalar_lea.sflag [#allocation3], 9
    %p513 = scmp.lt.u32.totalorder 1, 8
    %p514 = pneg %p513
    // Predicated region
    $region280: #{tpu_custom_call.1} parent=1 // pred_check
      _
    $region281: #{tpu_custom_call.1} parent=1 // pred_check_branch
      %516 = sbr.rel (%p513) target = $region283
    $region282: #{tpu_custom_call.1} parent=1 // pred_region
      %s531 = sand.u32 1, 7
      %p532 = scmp.eq.s32.totalorder %s531, 0
      %p533 = pneg %p532
      // Predicated region
      $region295: #{tpu_custom_call.1} parent=282 // pred_check
        _
      $region296: #{tpu_custom_call.1} parent=282 // pred_check_branch
        %535 = sbr.rel (%p532) target = $region298
      $region297: #{tpu_custom_call.1} parent=282 // pred_region
        %s536 = sand.u32 1, 7
        %s537 = ssub.s32 1, %s536
        %s538 = scalar_lea.vmem %s509, %s537 [#allocation6]
        %s539 = ssub.s32 1, %s536
        %s540 = scalar_lea.vmem %s510, %s539 [#allocation2]
        %s541 = sshllo.u32 0, %s536
        loop: start=0, step=1, limit=1
        $region299: #{tpu_custom_call.1} parent=297 // loop_pre_header
          _
        $region300: #{tpu_custom_call.1} parent=297 // loop_header
          %s543 = sphi 0, %s547
          %p544 = scmp.ge.s32.totalorder %s543, 1
          %s548 = sphi %s538, %s538
          %s549 = sphi %s540, %s540
        $region301: #{tpu_custom_call.1} parent=297 // loop_header_branch
          %546 = sbr.rel (%p544) target = $region305
        $region302: #{tpu_custom_call.1} parent=297 // loop_body
          %v550 = vld [vmem:[%s548] sm:%s541]
          %551 = vst [vmem:[%s549] sm:%s541] %v550
        $region303: #{tpu_custom_call.1} parent=297 // loop_footer
          %s547 = sadd.s32 1, %s543
        $region304: #{tpu_custom_call.1} parent=297 // loop_footer_branch
          %542 = sbr.rel target = $region300
        $region305: #{tpu_custom_call.1} parent=297 // loop_exit
          _
      $region298: #{tpu_custom_call.1} parent=282 // pred_fallthru
        _
    $region283: #{tpu_custom_call.1} parent=1 // pred_fallthru
      _
    // Predicated region
    $region284: #{tpu_custom_call.1} parent=1 // pred_check
      %p517 = pneg %p513
    $region285: #{tpu_custom_call.1} parent=1 // pred_check_branch
      %519 = sbr.rel (%p517) target = $region287
    $region286: #{tpu_custom_call.1} parent=1 // pred_region
      %s520 = sshllo.u32 0, 1
      loop: start=0, step=1, limit=1
      $region288: #{tpu_custom_call.1} parent=286 // loop_pre_header
        _
      $region289: #{tpu_custom_call.1} parent=286 // loop_header
        %s522 = sphi 0, %s526
        %p523 = scmp.ge.s32.totalorder %s522, 1
        %s527 = sphi %s509, %s509
        %s528 = sphi %s510, %s510
      $region290: #{tpu_custom_call.1} parent=286 // loop_header_branch
        %525 = sbr.rel (%p523) target = $region294
      $region291: #{tpu_custom_call.1} parent=286 // loop_body
        %v529 = vld [vmem:[%s527] sm:%s520]
        %530 = vst [vmem:[%s528] sm:%s520] %v529
      $region292: #{tpu_custom_call.1} parent=286 // loop_footer
        %s526 = sadd.s32 1, %s522
      $region293: #{tpu_custom_call.1} parent=286 // loop_footer_branch
        %521 = sbr.rel target = $region289
      $region294: #{tpu_custom_call.1} parent=286 // loop_exit
        _
    $region287: #{tpu_custom_call.1} parent=1 // pred_fallthru
      _
    // Predicated region
    $region306: #{tpu_custom_call.1} parent=1 // pred_check
      _
    $region307: #{tpu_custom_call.1} parent=1 // pred_check_branch
      %554 = sbr.rel (0) target = $region309
    $region308: #{tpu_custom_call.1} parent=1 // pred_region
      %555 = vsyncadd %s511, 16
    $region309: #{tpu_custom_call.1} parent=1 // pred_fallthru
      _
    %s556 = sadd.s32 %s28, 10
    %s557 = sld [smem:[#allocation5 + %s556]]
    %p558 = scmp.gt.s32.totalorder %s557, 0
    %s559 = scalar_select %p558, %s557, 0
    %p560 = scmp.lt.s32.totalorder %s559, 63
    %s561 = scalar_select %p560, %s559, 63
    %s562 = scalar_lea.vmem [#allocation6], %s561
    %s563 = scalar_lea.vmem [#allocation2], 10
    %s564 = scalar_lea.sflag [#allocation3], 10
    %p566 = scmp.lt.u32.totalorder 1, 8
    %p567 = pneg %p566
    // Predicated region
    $region310: #{tpu_custom_call.1} parent=1 // pred_check
      _
    $region311: #{tpu_custom_call.1} parent=1 // pred_check_branch
      %569 = sbr.rel (%p566) target = $region313
    $region312: #{tpu_custom_call.1} parent=1 // pred_region
      %s584 = sand.u32 1, 7
      %p585 = scmp.eq.s32.totalorder %s584, 0
      %p586 = pneg %p585
      // Predicated region
      $region325: #{tpu_custom_call.1} parent=312 // pred_check
        _
      $region326: #{tpu_custom_call.1} parent=312 // pred_check_branch
        %588 = sbr.rel (%p585) target = $region328
      $region327: #{tpu_custom_call.1} parent=312 // pred_region
        %s589 = sand.u32 1, 7
        %s590 = ssub.s32 1, %s589
        %s591 = scalar_lea.vmem %s562, %s590 [#allocation6]
        %s592 = ssub.s32 1, %s589
        %s593 = scalar_lea.vmem %s563, %s592 [#allocation2]
        %s594 = sshllo.u32 0, %s589
        loop: start=0, step=1, limit=1
        $region329: #{tpu_custom_call.1} parent=327 // loop_pre_header
          _
        $region330: #{tpu_custom_call.1} parent=327 // loop_header
          %s596 = sphi 0, %s600
          %p597 = scmp.ge.s32.totalorder %s596, 1
          %s601 = sphi %s591, %s591
          %s602 = sphi %s593, %s593
        $region331: #{tpu_custom_call.1} parent=327 // loop_header_branch
          %599 = sbr.rel (%p597) target = $region335
        $region332: #{tpu_custom_call.1} parent=327 // loop_body
          %v603 = vld [vmem:[%s601] sm:%s594]
          %604 = vst [vmem:[%s602] sm:%s594] %v603
        $region333: #{tpu_custom_call.1} parent=327 // loop_footer
          %s600 = sadd.s32 1, %s596
        $region334: #{tpu_custom_call.1} parent=327 // loop_footer_branch
          %595 = sbr.rel target = $region330
        $region335: #{tpu_custom_call.1} parent=327 // loop_exit
          _
      $region328: #{tpu_custom_call.1} parent=312 // pred_fallthru
        _
    $region313: #{tpu_custom_call.1} parent=1 // pred_fallthru
      _
    // Predicated region
    $region314: #{tpu_custom_call.1} parent=1 // pred_check
      %p570 = pneg %p566
    $region315: #{tpu_custom_call.1} parent=1 // pred_check_branch
      %572 = sbr.rel (%p570) target = $region317
    $region316: #{tpu_custom_call.1} parent=1 // pred_region
      %s573 = sshllo.u32 0, 1
      loop: start=0, step=1, limit=1
      $region318: #{tpu_custom_call.1} parent=316 // loop_pre_header
        _
      $region319: #{tpu_custom_call.1} parent=316 // loop_header
        %s575 = sphi 0, %s579
        %p576 = scmp.ge.s32.totalorder %s575, 1
        %s580 = sphi %s562, %s562
        %s581 = sphi %s563, %s563
      $region320: #{tpu_custom_call.1} parent=316 // loop_header_branch
        %578 = sbr.rel (%p576) target = $region324
      $region321: #{tpu_custom_call.1} parent=316 // loop_body
        %v582 = vld [vmem:[%s580] sm:%s573]
        %583 = vst [vmem:[%s581] sm:%s573] %v582
      $region322: #{tpu_custom_call.1} parent=316 // loop_footer
        %s579 = sadd.s32 1, %s575
      $region323: #{tpu_custom_call.1} parent=316 // loop_footer_branch
        %574 = sbr.rel target = $region319
      $region324: #{tpu_custom_call.1} parent=316 // loop_exit
        _
    $region317: #{tpu_custom_call.1} parent=1 // pred_fallthru
      _
    // Predicated region
    $region336: #{tpu_custom_call.1} parent=1 // pred_check
      _
    $region337: #{tpu_custom_call.1} parent=1 // pred_check_branch
      %607 = sbr.rel (0) target = $region339
    $region338: #{tpu_custom_call.1} parent=1 // pred_region
      %608 = vsyncadd %s564, 16
    $region339: #{tpu_custom_call.1} parent=1 // pred_fallthru
      _
    %s609 = sadd.s32 %s28, 11
    %s610 = sld [smem:[#allocation5 + %s609]]
    %p611 = scmp.gt.s32.totalorder %s610, 0
    %s612 = scalar_select %p611, %s610, 0
    %p613 = scmp.lt.s32.totalorder %s612, 63
    %s614 = scalar_select %p613, %s612, 63
    %s615 = scalar_lea.vmem [#allocation6], %s614
    %s616 = scalar_lea.vmem [#allocation2], 11
    %s617 = scalar_lea.sflag [#allocation3], 11
    %p619 = scmp.lt.u32.totalorder 1, 8
    %p620 = pneg %p619
    // Predicated region
    $region340: #{tpu_custom_call.1} parent=1 // pred_check
      _
    $region341: #{tpu_custom_call.1} parent=1 // pred_check_branch
      %622 = sbr.rel (%p619) target = $region343
    $region342: #{tpu_custom_call.1} parent=1 // pred_region
      %s637 = sand.u32 1, 7
      %p638 = scmp.eq.s32.totalorder %s637, 0
      %p639 = pneg %p638
      // Predicated region
      $region355: #{tpu_custom_call.1} parent=342 // pred_check
        _
      $region356: #{tpu_custom_call.1} parent=342 // pred_check_branch
        %641 = sbr.rel (%p638) target = $region358
      $region357: #{tpu_custom_call.1} parent=342 // pred_region
        %s642 = sand.u32 1, 7
        %s643 = ssub.s32 1, %s642
        %s644 = scalar_lea.vmem %s615, %s643 [#allocation6]
        %s645 = ssub.s32 1, %s642
        %s646 = scalar_lea.vmem %s616, %s645 [#allocation2]
        %s647 = sshllo.u32 0, %s642
        loop: start=0, step=1, limit=1
        $region359: #{tpu_custom_call.1} parent=357 // loop_pre_header
          _
        $region360: #{tpu_custom_call.1} parent=357 // loop_header
          %s649 = sphi 0, %s653
          %p650 = scmp.ge.s32.totalorder %s649, 1
          %s654 = sphi %s644, %s644
          %s655 = sphi %s646, %s646
        $region361: #{tpu_custom_call.1} parent=357 // loop_header_branch
          %652 = sbr.rel (%p650) target = $region365
        $region362: #{tpu_custom_call.1} parent=357 // loop_body
          %v656 = vld [vmem:[%s654] sm:%s647]
          %657 = vst [vmem:[%s655] sm:%s647] %v656
        $region363: #{tpu_custom_call.1} parent=357 // loop_footer
          %s653 = sadd.s32 1, %s649
        $region364: #{tpu_custom_call.1} parent=357 // loop_footer_branch
          %648 = sbr.rel target = $region360
        $region365: #{tpu_custom_call.1} parent=357 // loop_exit
          _
      $region358: #{tpu_custom_call.1} parent=342 // pred_fallthru
        _
    $region343: #{tpu_custom_call.1} parent=1 // pred_fallthru
      _
    // Predicated region
    $region344: #{tpu_custom_call.1} parent=1 // pred_check
      %p623 = pneg %p619
    $region345: #{tpu_custom_call.1} parent=1 // pred_check_branch
      %625 = sbr.rel (%p623) target = $region347
    $region346: #{tpu_custom_call.1} parent=1 // pred_region
      %s626 = sshllo.u32 0, 1
      loop: start=0, step=1, limit=1
      $region348: #{tpu_custom_call.1} parent=346 // loop_pre_header
        _
      $region349: #{tpu_custom_call.1} parent=346 // loop_header
        %s628 = sphi 0, %s632
        %p629 = scmp.ge.s32.totalorder %s628, 1
        %s633 = sphi %s615, %s615
        %s634 = sphi %s616, %s616
      $region350: #{tpu_custom_call.1} parent=346 // loop_header_branch
        %631 = sbr.rel (%p629) target = $region354
      $region351: #{tpu_custom_call.1} parent=346 // loop_body
        %v635 = vld [vmem:[%s633] sm:%s626]
        %636 = vst [vmem:[%s634] sm:%s626] %v635
      $region352: #{tpu_custom_call.1} parent=346 // loop_footer
        %s632 = sadd.s32 1, %s628
      $region353: #{tpu_custom_call.1} parent=346 // loop_footer_branch
        %627 = sbr.rel target = $region349
      $region354: #{tpu_custom_call.1} parent=346 // loop_exit
        _
    $region347: #{tpu_custom_call.1} parent=1 // pred_fallthru
      _
    // Predicated region
    $region366: #{tpu_custom_call.1} parent=1 // pred_check
      _
    $region367: #{tpu_custom_call.1} parent=1 // pred_check_branch
      %660 = sbr.rel (0) target = $region369
    $region368: #{tpu_custom_call.1} parent=1 // pred_region
      %661 = vsyncadd %s617, 16
    $region369: #{tpu_custom_call.1} parent=1 // pred_fallthru
      _
    %s662 = sadd.s32 %s28, 12
    %s663 = sld [smem:[#allocation5 + %s662]]
    %p664 = scmp.gt.s32.totalorder %s663, 0
    %s665 = scalar_select %p664, %s663, 0
    %p666 = scmp.lt.s32.totalorder %s665, 63
    %s667 = scalar_select %p666, %s665, 63
    %s668 = scalar_lea.vmem [#allocation6], %s667
    %s669 = scalar_lea.vmem [#allocation2], 12
    %s670 = scalar_lea.sflag [#allocation3], 12
    %p672 = scmp.lt.u32.totalorder 1, 8
    %p673 = pneg %p672
    // Predicated region
    $region370: #{tpu_custom_call.1} parent=1 // pred_check
      _
    $region371: #{tpu_custom_call.1} parent=1 // pred_check_branch
      %675 = sbr.rel (%p672) target = $region373
    $region372: #{tpu_custom_call.1} parent=1 // pred_region
      %s690 = sand.u32 1, 7
      %p691 = scmp.eq.s32.totalorder %s690, 0
      %p692 = pneg %p691
      // Predicated region
      $region385: #{tpu_custom_call.1} parent=372 // pred_check
        _
      $region386: #{tpu_custom_call.1} parent=372 // pred_check_branch
        %694 = sbr.rel (%p691) target = $region388
      $region387: #{tpu_custom_call.1} parent=372 // pred_region
        %s695 = sand.u32 1, 7
        %s696 = ssub.s32 1, %s695
        %s697 = scalar_lea.vmem %s668, %s696 [#allocation6]
        %s698 = ssub.s32 1, %s695
        %s699 = scalar_lea.vmem %s669, %s698 [#allocation2]
        %s700 = sshllo.u32 0, %s695
        loop: start=0, step=1, limit=1
        $region389: #{tpu_custom_call.1} parent=387 // loop_pre_header
          _
        $region390: #{tpu_custom_call.1} parent=387 // loop_header
          %s702 = sphi 0, %s706
          %p703 = scmp.ge.s32.totalorder %s702, 1
          %s707 = sphi %s697, %s697
          %s708 = sphi %s699, %s699
        $region391: #{tpu_custom_call.1} parent=387 // loop_header_branch
          %705 = sbr.rel (%p703) target = $region395
        $region392: #{tpu_custom_call.1} parent=387 // loop_body
          %v709 = vld [vmem:[%s707] sm:%s700]
          %710 = vst [vmem:[%s708] sm:%s700] %v709
        $region393: #{tpu_custom_call.1} parent=387 // loop_footer
          %s706 = sadd.s32 1, %s702
        $region394: #{tpu_custom_call.1} parent=387 // loop_footer_branch
          %701 = sbr.rel target = $region390
        $region395: #{tpu_custom_call.1} parent=387 // loop_exit
          _
      $region388: #{tpu_custom_call.1} parent=372 // pred_fallthru
        _
    $region373: #{tpu_custom_call.1} parent=1 // pred_fallthru
      _
    // Predicated region
    $region374: #{tpu_custom_call.1} parent=1 // pred_check
      %p676 = pneg %p672
    $region375: #{tpu_custom_call.1} parent=1 // pred_check_branch
      %678 = sbr.rel (%p676) target = $region377
    $region376: #{tpu_custom_call.1} parent=1 // pred_region
      %s679 = sshllo.u32 0, 1
      loop: start=0, step=1, limit=1
      $region378: #{tpu_custom_call.1} parent=376 // loop_pre_header
        _
      $region379: #{tpu_custom_call.1} parent=376 // loop_header
        %s681 = sphi 0, %s685
        %p682 = scmp.ge.s32.totalorder %s681, 1
        %s686 = sphi %s668, %s668
        %s687 = sphi %s669, %s669
      $region380: #{tpu_custom_call.1} parent=376 // loop_header_branch
        %684 = sbr.rel (%p682) target = $region384
      $region381: #{tpu_custom_call.1} parent=376 // loop_body
        %v688 = vld [vmem:[%s686] sm:%s679]
        %689 = vst [vmem:[%s687] sm:%s679] %v688
      $region382: #{tpu_custom_call.1} parent=376 // loop_footer
        %s685 = sadd.s32 1, %s681
      $region383: #{tpu_custom_call.1} parent=376 // loop_footer_branch
        %680 = sbr.rel target = $region379
      $region384: #{tpu_custom_call.1} parent=376 // loop_exit
        _
    $region377: #{tpu_custom_call.1} parent=1 // pred_fallthru
      _
    // Predicated region
    $region396: #{tpu_custom_call.1} parent=1 // pred_check
      _
    $region397: #{tpu_custom_call.1} parent=1 // pred_check_branch
      %713 = sbr.rel (0) target = $region399
    $region398: #{tpu_custom_call.1} parent=1 // pred_region
      %714 = vsyncadd %s670, 16
    $region399: #{tpu_custom_call.1} parent=1 // pred_fallthru
      _
    %s715 = sadd.s32 %s28, 13
    %s716 = sld [smem:[#allocation5 + %s715]]
    %p717 = scmp.gt.s32.totalorder %s716, 0
    %s718 = scalar_select %p717, %s716, 0
    %p719 = scmp.lt.s32.totalorder %s718, 63
    %s720 = scalar_select %p719, %s718, 63
    %s721 = scalar_lea.vmem [#allocation6], %s720
    %s722 = scalar_lea.vmem [#allocation2], 13
    %s723 = scalar_lea.sflag [#allocation3], 13
    %p725 = scmp.lt.u32.totalorder 1, 8
    %p726 = pneg %p725
    // Predicated region
    $region400: #{tpu_custom_call.1} parent=1 // pred_check
      _
    $region401: #{tpu_custom_call.1} parent=1 // pred_check_branch
      %728 = sbr.rel (%p725) target = $region403
    $region402: #{tpu_custom_call.1} parent=1 // pred_region
      %s743 = sand.u32 1, 7
      %p744 = scmp.eq.s32.totalorder %s743, 0
      %p745 = pneg %p744
      // Predicated region
      $region415: #{tpu_custom_call.1} parent=402 // pred_check
        _
      $region416: #{tpu_custom_call.1} parent=402 // pred_check_branch
        %747 = sbr.rel (%p744) target = $region418
      $region417: #{tpu_custom_call.1} parent=402 // pred_region
        %s748 = sand.u32 1, 7
        %s749 = ssub.s32 1, %s748
        %s750 = scalar_lea.vmem %s721, %s749 [#allocation6]
        %s751 = ssub.s32 1, %s748
        %s752 = scalar_lea.vmem %s722, %s751 [#allocation2]
        %s753 = sshllo.u32 0, %s748
        loop: start=0, step=1, limit=1
        $region419: #{tpu_custom_call.1} parent=417 // loop_pre_header
          _
        $region420: #{tpu_custom_call.1} parent=417 // loop_header
          %s755 = sphi 0, %s759
          %p756 = scmp.ge.s32.totalorder %s755, 1
          %s760 = sphi %s750, %s750
          %s761 = sphi %s752, %s752
        $region421: #{tpu_custom_call.1} parent=417 // loop_header_branch
          %758 = sbr.rel (%p756) target = $region425
        $region422: #{tpu_custom_call.1} parent=417 // loop_body
          %v762 = vld [vmem:[%s760] sm:%s753]
          %763 = vst [vmem:[%s761] sm:%s753] %v762
        $region423: #{tpu_custom_call.1} parent=417 // loop_footer
          %s759 = sadd.s32 1, %s755
        $region424: #{tpu_custom_call.1} parent=417 // loop_footer_branch
          %754 = sbr.rel target = $region420
        $region425: #{tpu_custom_call.1} parent=417 // loop_exit
          _
      $region418: #{tpu_custom_call.1} parent=402 // pred_fallthru
        _
    $region403: #{tpu_custom_call.1} parent=1 // pred_fallthru
      _
    // Predicated region
    $region404: #{tpu_custom_call.1} parent=1 // pred_check
      %p729 = pneg %p725
    $region405: #{tpu_custom_call.1} parent=1 // pred_check_branch
      %731 = sbr.rel (%p729) target = $region407
    $region406: #{tpu_custom_call.1} parent=1 // pred_region
      %s732 = sshllo.u32 0, 1
      loop: start=0, step=1, limit=1
      $region408: #{tpu_custom_call.1} parent=406 // loop_pre_header
        _
      $region409: #{tpu_custom_call.1} parent=406 // loop_header
        %s734 = sphi 0, %s738
        %p735 = scmp.ge.s32.totalorder %s734, 1
        %s739 = sphi %s721, %s721
        %s740 = sphi %s722, %s722
      $region410: #{tpu_custom_call.1} parent=406 // loop_header_branch
        %737 = sbr.rel (%p735) target = $region414
      $region411: #{tpu_custom_call.1} parent=406 // loop_body
        %v741 = vld [vmem:[%s739] sm:%s732]
        %742 = vst [vmem:[%s740] sm:%s732] %v741
      $region412: #{tpu_custom_call.1} parent=406 // loop_footer
        %s738 = sadd.s32 1, %s734
      $region413: #{tpu_custom_call.1} parent=406 // loop_footer_branch
        %733 = sbr.rel target = $region409
      $region414: #{tpu_custom_call.1} parent=406 // loop_exit
        _
    $region407: #{tpu_custom_call.1} parent=1 // pred_fallthru
      _
    // Predicated region
    $region426: #{tpu_custom_call.1} parent=1 // pred_check
      _
    $region427: #{tpu_custom_call.1} parent=1 // pred_check_branch
      %766 = sbr.rel (0) target = $region429
    $region428: #{tpu_custom_call.1} parent=1 // pred_region
      %767 = vsyncadd %s723, 16
    $region429: #{tpu_custom_call.1} parent=1 // pred_fallthru
      _
    %s768 = sadd.s32 %s28, 14
    %s769 = sld [smem:[#allocation5 + %s768]]
    %p770 = scmp.gt.s32.totalorder %s769, 0
    %s771 = scalar_select %p770, %s769, 0
    %p772 = scmp.lt.s32.totalorder %s771, 63
    %s773 = scalar_select %p772, %s771, 63
    %s774 = scalar_lea.vmem [#allocation6], %s773
    %s775 = scalar_lea.vmem [#allocation2], 14
    %s776 = scalar_lea.sflag [#allocation3], 14
    %p778 = scmp.lt.u32.totalorder 1, 8
    %p779 = pneg %p778
    // Predicated region
    $region430: #{tpu_custom_call.1} parent=1 // pred_check
      _
    $region431: #{tpu_custom_call.1} parent=1 // pred_check_branch
      %781 = sbr.rel (%p778) target = $region433
    $region432: #{tpu_custom_call.1} parent=1 // pred_region
      %s796 = sand.u32 1, 7
      %p797 = scmp.eq.s32.totalorder %s796, 0
      %p798 = pneg %p797
      // Predicated region
      $region445: #{tpu_custom_call.1} parent=432 // pred_check
        _
      $region446: #{tpu_custom_call.1} parent=432 // pred_check_branch
        %800 = sbr.rel (%p797) target = $region448
      $region447: #{tpu_custom_call.1} parent=432 // pred_region
        %s801 = sand.u32 1, 7
        %s802 = ssub.s32 1, %s801
        %s803 = scalar_lea.vmem %s774, %s802 [#allocation6]
        %s804 = ssub.s32 1, %s801
        %s805 = scalar_lea.vmem %s775, %s804 [#allocation2]
        %s806 = sshllo.u32 0, %s801
        loop: start=0, step=1, limit=1
        $region449: #{tpu_custom_call.1} parent=447 // loop_pre_header
          _
        $region450: #{tpu_custom_call.1} parent=447 // loop_header
          %s808 = sphi 0, %s812
          %p809 = scmp.ge.s32.totalorder %s808, 1
          %s813 = sphi %s803, %s803
          %s814 = sphi %s805, %s805
        $region451: #{tpu_custom_call.1} parent=447 // loop_header_branch
          %811 = sbr.rel (%p809) target = $region455
        $region452: #{tpu_custom_call.1} parent=447 // loop_body
          %v815 = vld [vmem:[%s813] sm:%s806]
          %816 = vst [vmem:[%s814] sm:%s806] %v815
        $region453: #{tpu_custom_call.1} parent=447 // loop_footer
          %s812 = sadd.s32 1, %s808
        $region454: #{tpu_custom_call.1} parent=447 // loop_footer_branch
          %807 = sbr.rel target = $region450
        $region455: #{tpu_custom_call.1} parent=447 // loop_exit
          _
      $region448: #{tpu_custom_call.1} parent=432 // pred_fallthru
        _
    $region433: #{tpu_custom_call.1} parent=1 // pred_fallthru
      _
    // Predicated region
    $region434: #{tpu_custom_call.1} parent=1 // pred_check
      %p782 = pneg %p778
    $region435: #{tpu_custom_call.1} parent=1 // pred_check_branch
      %784 = sbr.rel (%p782) target = $region437
    $region436: #{tpu_custom_call.1} parent=1 // pred_region
      %s785 = sshllo.u32 0, 1
      loop: start=0, step=1, limit=1
      $region438: #{tpu_custom_call.1} parent=436 // loop_pre_header
        _
      $region439: #{tpu_custom_call.1} parent=436 // loop_header
        %s787 = sphi 0, %s791
        %p788 = scmp.ge.s32.totalorder %s787, 1
        %s792 = sphi %s774, %s774
        %s793 = sphi %s775, %s775
      $region440: #{tpu_custom_call.1} parent=436 // loop_header_branch
        %790 = sbr.rel (%p788) target = $region444
      $region441: #{tpu_custom_call.1} parent=436 // loop_body
        %v794 = vld [vmem:[%s792] sm:%s785]
        %795 = vst [vmem:[%s793] sm:%s785] %v794
      $region442: #{tpu_custom_call.1} parent=436 // loop_footer
        %s791 = sadd.s32 1, %s787
      $region443: #{tpu_custom_call.1} parent=436 // loop_footer_branch
        %786 = sbr.rel target = $region439
      $region444: #{tpu_custom_call.1} parent=436 // loop_exit
        _
    $region437: #{tpu_custom_call.1} parent=1 // pred_fallthru
      _
    // Predicated region
    $region456: #{tpu_custom_call.1} parent=1 // pred_check
      _
    $region457: #{tpu_custom_call.1} parent=1 // pred_check_branch
      %819 = sbr.rel (0) target = $region459
    $region458: #{tpu_custom_call.1} parent=1 // pred_region
      %820 = vsyncadd %s776, 16
    $region459: #{tpu_custom_call.1} parent=1 // pred_fallthru
      _
    %s821 = sadd.s32 %s28, 15
    %s822 = sld [smem:[#allocation5 + %s821]]
    %p823 = scmp.gt.s32.totalorder %s822, 0
    %s824 = scalar_select %p823, %s822, 0
    %p825 = scmp.lt.s32.totalorder %s824, 63
    %s826 = scalar_select %p825, %s824, 63
    %s827 = scalar_lea.vmem [#allocation6], %s826
    %s828 = scalar_lea.vmem [#allocation2], 15
    %s829 = scalar_lea.sflag [#allocation3], 15
    %p831 = scmp.lt.u32.totalorder 1, 8
    %p832 = pneg %p831
    // Predicated region
    $region460: #{tpu_custom_call.1} parent=1 // pred_check
      _
    $region461: #{tpu_custom_call.1} parent=1 // pred_check_branch
      %834 = sbr.rel (%p831) target = $region463
    $region462: #{tpu_custom_call.1} parent=1 // pred_region
      %s849 = sand.u32 1, 7
      %p850 = scmp.eq.s32.totalorder %s849, 0
      %p851 = pneg %p850
      // Predicated region
      $region475: #{tpu_custom_call.1} parent=462 // pred_check
        _
      $region476: #{tpu_custom_call.1} parent=462 // pred_check_branch
        %853 = sbr.rel (%p850) target = $region478
      $region477: #{tpu_custom_call.1} parent=462 // pred_region
        %s854 = sand.u32 1, 7
        %s855 = ssub.s32 1, %s854
        %s856 = scalar_lea.vmem %s827, %s855 [#allocation6]
        %s857 = ssub.s32 1, %s854
        %s858 = scalar_lea.vmem %s828, %s857 [#allocation2]
        %s859 = sshllo.u32 0, %s854
        loop: start=0, step=1, limit=1
        $region479: #{tpu_custom_call.1} parent=477 // loop_pre_header
          _
        $region480: #{tpu_custom_call.1} parent=477 // loop_header
          %s861 = sphi 0, %s865
          %p862 = scmp.ge.s32.totalorder %s861, 1
          %s866 = sphi %s856, %s856
          %s867 = sphi %s858, %s858
        $region481: #{tpu_custom_call.1} parent=477 // loop_header_branch
          %864 = sbr.rel (%p862) target = $region485
        $region482: #{tpu_custom_call.1} parent=477 // loop_body
          %v868 = vld [vmem:[%s866] sm:%s859]
          %869 = vst [vmem:[%s867] sm:%s859] %v868
        $region483: #{tpu_custom_call.1} parent=477 // loop_footer
          %s865 = sadd.s32 1, %s861
        $region484: #{tpu_custom_call.1} parent=477 // loop_footer_branch
          %860 = sbr.rel target = $region480
        $region485: #{tpu_custom_call.1} parent=477 // loop_exit
          _
      $region478: #{tpu_custom_call.1} parent=462 // pred_fallthru
        _
    $region463: #{tpu_custom_call.1} parent=1 // pred_fallthru
      _
    // Predicated region
    $region464: #{tpu_custom_call.1} parent=1 // pred_check
      %p835 = pneg %p831
    $region465: #{tpu_custom_call.1} parent=1 // pred_check_branch
      %837 = sbr.rel (%p835) target = $region467
    $region466: #{tpu_custom_call.1} parent=1 // pred_region
      %s838 = sshllo.u32 0, 1
      loop: start=0, step=1, limit=1
      $region468: #{tpu_custom_call.1} parent=466 // loop_pre_header
        _
      $region469: #{tpu_custom_call.1} parent=466 // loop_header
        %s840 = sphi 0, %s844
        %p841 = scmp.ge.s32.totalorder %s840, 1
        %s845 = sphi %s827, %s827
        %s846 = sphi %s828, %s828
      $region470: #{tpu_custom_call.1} parent=466 // loop_header_branch
        %843 = sbr.rel (%p841) target = $region474
      $region471: #{tpu_custom_call.1} parent=466 // loop_body
        %v847 = vld [vmem:[%s845] sm:%s838]
        %848 = vst [vmem:[%s846] sm:%s838] %v847
      $region472: #{tpu_custom_call.1} parent=466 // loop_footer
        %s844 = sadd.s32 1, %s840
      $region473: #{tpu_custom_call.1} parent=466 // loop_footer_branch
        %839 = sbr.rel target = $region469
      $region474: #{tpu_custom_call.1} parent=466 // loop_exit
        _
    $region467: #{tpu_custom_call.1} parent=1 // pred_fallthru
      _
    // Predicated region
    $region486: #{tpu_custom_call.1} parent=1 // pred_check
      _
    $region487: #{tpu_custom_call.1} parent=1 // pred_check_branch
      %872 = sbr.rel (0) target = $region489
    $region488: #{tpu_custom_call.1} parent=1 // pred_region
      %873 = vsyncadd %s829, 16
    $region489: #{tpu_custom_call.1} parent=1 // pred_fallthru
      _
    loop: start=0, step=1, limit=16
    $region490: #{tpu_custom_call.1} parent=1 // loop_pre_header
      _
    $region491: #{tpu_custom_call.1} parent=1 // loop_header
      %s875 = sphi 0, %s879
      %p876 = scmp.ge.s32.totalorder %s875, 16
    $region492: #{tpu_custom_call.1} parent=1 // loop_header_branch
      %878 = sbr.rel (%p876) target = $region496
    $region493: #{tpu_custom_call.1} parent=1 // loop_body
      %p880 = scmp.lt.s32.totalorder %s875, 0
      %s881 = ssub.s32 0, %s875
      %s882 = scalar_select %p880, %s881, %s875
      %s883 = sand.u32 %s882, 15
      %s884 = ssub.s32 0, %s883
      %s885 = scalar_select %p880, %s884, %s883
      %p886 = scmp.ne.s32.totalorder %s885, 0
      %p887 = scmp.lt.s32.totalorder %s885, 0
      %p888 = pnand %p887, %p886
      %p889 = pneg %p888
      %s890 = sadd.s32 %s885, 16
      %s891 = scalar_select %p889, %s890, %s885
      %s892 = scalar_lea.sflag [#allocation3], %s891
      %894 = dma.done %s892, 16
      %s895 = sadd.s32 %s875, 16
      %p896 = scmp.lt.s32.totalorder %s895, 16
      // Predicated region
      $region497: #{tpu_custom_call.1} parent=493 // pred_check
        %p897 = pneg %p896
      $region498: #{tpu_custom_call.1} parent=493 // pred_check_branch
        %899 = sbr.rel (%p897) target = $region500
      $region499: #{tpu_custom_call.1} parent=493 // pred_region
        %s900 = sadd.s32 %s28, %s895
        %s901 = sld [smem:[#allocation5 + %s900]]
        %p902 = scmp.gt.s32.totalorder %s901, 0
        %s903 = scalar_select %p902, %s901, 0
        %p904 = scmp.lt.s32.totalorder %s903, 63
        %s905 = scalar_select %p904, %s903, 63
        %p906 = scmp.lt.s32.totalorder %s895, 0
        %s907 = ssub.s32 0, %s895
        %s908 = scalar_select %p906, %s907, %s895
        %s909 = sand.u32 %s908, 15
        %s910 = ssub.s32 0, %s909
        %s911 = scalar_select %p906, %s910, %s909
        %p912 = scmp.ne.s32.totalorder %s911, 0
        %p913 = scmp.lt.s32.totalorder %s911, 0
        %p914 = pnand %p913, %p912
        %p915 = pneg %p914
        %s916 = sadd.s32 %s911, 16
        %s917 = scalar_select %p915, %s916, %s911
        %s918 = scalar_lea.vmem [#allocation6], %s905
        %s919 = scalar_lea.vmem [#allocation2], %s895
        %s920 = scalar_lea.sflag [#allocation3], %s917
        %p922 = scmp.lt.u32.totalorder 1, 8
        %p923 = pneg %p922
        // Predicated region
        $region501: #{tpu_custom_call.1} parent=499 // pred_check
          _
        $region502: #{tpu_custom_call.1} parent=499 // pred_check_branch
          %925 = sbr.rel (%p922) target = $region504
        $region503: #{tpu_custom_call.1} parent=499 // pred_region
          %s940 = sand.u32 1, 7
          %p941 = scmp.eq.s32.totalorder %s940, 0
          %p942 = pneg %p941
          // Predicated region
          $region516: #{tpu_custom_call.1} parent=503 // pred_check
            _
          $region517: #{tpu_custom_call.1} parent=503 // pred_check_branch
            %944 = sbr.rel (%p941) target = $region519
          $region518: #{tpu_custom_call.1} parent=503 // pred_region
            %s945 = sand.u32 1, 7
            %s946 = ssub.s32 1, %s945
            %s947 = scalar_lea.vmem %s918, %s946 [#allocation6]
            %s948 = ssub.s32 1, %s945
            %s949 = scalar_lea.vmem %s919, %s948 [#allocation2]
            %s950 = sshllo.u32 0, %s945
            loop: start=0, step=1, limit=1
            $region520: #{tpu_custom_call.1} parent=518 // loop_pre_header
              _
            $region521: #{tpu_custom_call.1} parent=518 // loop_header
              %s952 = sphi 0, %s956
              %p953 = scmp.ge.s32.totalorder %s952, 1
              %s957 = sphi %s947, %s947
              %s958 = sphi %s949, %s949
            $region522: #{tpu_custom_call.1} parent=518 // loop_header_branch
              %955 = sbr.rel (%p953) target = $region526
            $region523: #{tpu_custom_call.1} parent=518 // loop_body
              %v959 = vld [vmem:[%s957] sm:%s950]
              %960 = vst [vmem:[%s958] sm:%s950] %v959
            $region524: #{tpu_custom_call.1} parent=518 // loop_footer
              %s956 = sadd.s32 1, %s952
            $region525: #{tpu_custom_call.1} parent=518 // loop_footer_branch
              %951 = sbr.rel target = $region521
            $region526: #{tpu_custom_call.1} parent=518 // loop_exit
              _
          $region519: #{tpu_custom_call.1} parent=503 // pred_fallthru
            _
        $region504: #{tpu_custom_call.1} parent=499 // pred_fallthru
          _
        // Predicated region
        $region505: #{tpu_custom_call.1} parent=499 // pred_check
          %p926 = pneg %p922
        $region506: #{tpu_custom_call.1} parent=499 // pred_check_branch
          %928 = sbr.rel (%p926) target = $region508
        $region507: #{tpu_custom_call.1} parent=499 // pred_region
          %s929 = sshllo.u32 0, 1
          loop: start=0, step=1, limit=1
          $region509: #{tpu_custom_call.1} parent=507 // loop_pre_header
            _
          $region510: #{tpu_custom_call.1} parent=507 // loop_header
            %s931 = sphi 0, %s935
            %p932 = scmp.ge.s32.totalorder %s931, 1
            %s936 = sphi %s918, %s918
            %s937 = sphi %s919, %s919
          $region511: #{tpu_custom_call.1} parent=507 // loop_header_branch
            %934 = sbr.rel (%p932) target = $region515
          $region512: #{tpu_custom_call.1} parent=507 // loop_body
            %v938 = vld [vmem:[%s936] sm:%s929]
            %939 = vst [vmem:[%s937] sm:%s929] %v938
          $region513: #{tpu_custom_call.1} parent=507 // loop_footer
            %s935 = sadd.s32 1, %s931
          $region514: #{tpu_custom_call.1} parent=507 // loop_footer_branch
            %930 = sbr.rel target = $region510
          $region515: #{tpu_custom_call.1} parent=507 // loop_exit
            _
        $region508: #{tpu_custom_call.1} parent=499 // pred_fallthru
          _
        // Predicated region
        $region527: #{tpu_custom_call.1} parent=499 // pred_check
          _
        $region528: #{tpu_custom_call.1} parent=499 // pred_check_branch
          %963 = sbr.rel (0) target = $region530
        $region529: #{tpu_custom_call.1} parent=499 // pred_region
          %964 = vsyncadd %s920, 16
        $region530: #{tpu_custom_call.1} parent=499 // pred_fallthru
          _
      $region500: #{tpu_custom_call.1} parent=493 // pred_fallthru
        _
    $region494: #{tpu_custom_call.1} parent=1 // loop_footer
      %s879 = sadd.s32 1, %s875
    $region495: #{tpu_custom_call.1} parent=1 // loop_footer_branch
      %874 = sbr.rel target = $region491
    $region496: #{tpu_custom_call.1} parent=1 // loop_exit
      _
    %v965 = vld [vmem:[#allocation2] sm:$0xff]
    %v966 = vld [vmem:[#allocation2 + $0x8] sm:$0xff]
    %v967 = vmul.f32 %v965, 11.313708
    %v968 = vmul.f32 %v966, 11.313708
    %969 = vst [vmem:[#allocation9] sm:$0xff] %v967
    %970 = vst [vmem:[#allocation9 + $0x8] sm:$0xff] %v968
    // Predicated region
    $region531: #{tpu_custom_call.1} parent=1 // pred_check
      _
    $region532: #{tpu_custom_call.1} parent=1 // pred_check_branch
      %972 = sbr.rel (0) target = $region534
    $region533: #{tpu_custom_call.1} parent=1 // pred_region
      %s974 = ssub.s32 256, 256
      %975 = vsyncadd [#allocation8], %s974
      %s976 = sshll.u32 [#allocation9], 4
      %s977 = int_to_ptr.vmem [resolvable:$true] %s976
      %982 = dma.vmem_to_hbm [thread:$0]  %s977, 256, %s2, [#allocation8], 128, 128, 8
    $region534: #{tpu_custom_call.1} parent=1 // pred_fallthru
      _
    // Predicated region
    $region535: #{tpu_custom_call.1} parent=1 // pred_check
      _
    $region536: #{tpu_custom_call.1} parent=1 // pred_check_branch
      %984 = sbr.rel (0) target = $region538
    $region537: #{tpu_custom_call.1} parent=1 // pred_region
      %985 = dma.done [#allocation8], 256
    $region538: #{tpu_custom_call.1} parent=1 // pred_fallthru
      _
    %986 = vsyncpa [#allocation7], 1
    %987 = vsyncpa [#allocation8], 1
  %988 = vsyncmov [#allocation3]
  %s989 = vpop.sfrf %988
  %p990 = scmp.eq.s32.totalorder %s989, 0
  %p991 = pneg %p990
  %993 = shalt.err (%p991)
  %s994 = scalar_lea.sflag [#allocation3], 1
  %995 = vsyncmov %s994
  %s996 = vpop.sfrf %995
  %p997 = scmp.eq.s32.totalorder %s996, 0
  %p998 = pneg %p997
  %1000 = shalt.err (%p998)
  %s1001 = scalar_lea.sflag [#allocation3], 2
  %1002 = vsyncmov %s1001
  %s1003 = vpop.sfrf %1002
  %p1004 = scmp.eq.s32.totalorder %s1003, 0
  %p1005 = pneg %p1004
  %1007 = shalt.err (%p1005)
  %s1008 = scalar_lea.sflag [#allocation3], 3
  %1009 = vsyncmov %s1008
  %s1010 = vpop.sfrf %1009
  %p1011 = scmp.eq.s32.totalorder %s1010, 0
  %p1012 = pneg %p1011
  %1014 = shalt.err (%p1012)
  %s1015 = scalar_lea.sflag [#allocation3], 4
  %1016 = vsyncmov %s1015
  %s1017 = vpop.sfrf %1016
  %p1018 = scmp.eq.s32.totalorder %s1017, 0
  %p1019 = pneg %p1018
  %1021 = shalt.err (%p1019)
  %s1022 = scalar_lea.sflag [#allocation3], 5
  %1023 = vsyncmov %s1022
  %s1024 = vpop.sfrf %1023
  %p1025 = scmp.eq.s32.totalorder %s1024, 0
  %p1026 = pneg %p1025
  %1028 = shalt.err (%p1026)
  %s1029 = scalar_lea.sflag [#allocation3], 6
  %1030 = vsyncmov %s1029
  %s1031 = vpop.sfrf %1030
  %p1032 = scmp.eq.s32.totalorder %s1031, 0
  %p1033 = pneg %p1032
  %1035 = shalt.err (%p1033)
  %s1036 = scalar_lea.sflag [#allocation3], 7
  %1037 = vsyncmov %s1036
  %s1038 = vpop.sfrf %1037
  %p1039 = scmp.eq.s32.totalorder %s1038, 0
  %p1040 = pneg %p1039
  %1042 = shalt.err (%p1040)
  %s1043 = scalar_lea.sflag [#allocation3], 8
  %1044 = vsyncmov %s1043
  %s1045 = vpop.sfrf %1044
  %p1046 = scmp.eq.s32.totalorder %s1045, 0
  %p1047 = pneg %p1046
  %1049 = shalt.err (%p1047)
  %s1050 = scalar_lea.sflag [#allocation3], 9
  %1051 = vsyncmov %s1050
  %s1052 = vpop.sfrf %1051
  %p1053 = scmp.eq.s32.totalorder %s1052, 0
  %p1054 = pneg %p1053
  %1056 = shalt.err (%p1054)
  %s1057 = scalar_lea.sflag [#allocation3], 10
  %1058 = vsyncmov %s1057
  %s1059 = vpop.sfrf %1058
  %p1060 = scmp.eq.s32.totalorder %s1059, 0
  %p1061 = pneg %p1060
  %1063 = shalt.err (%p1061)
  %s1064 = scalar_lea.sflag [#allocation3], 11
  %1065 = vsyncmov %s1064
  %s1066 = vpop.sfrf %1065
  %p1067 = scmp.eq.s32.totalorder %s1066, 0
  %p1068 = pneg %p1067
  %1070 = shalt.err (%p1068)
  %s1071 = scalar_lea.sflag [#allocation3], 12
  %1072 = vsyncmov %s1071
  %s1073 = vpop.sfrf %1072
  %p1074 = scmp.eq.s32.totalorder %s1073, 0
  %p1075 = pneg %p1074
  %1077 = shalt.err (%p1075)
  %s1078 = scalar_lea.sflag [#allocation3], 13
  %1079 = vsyncmov %s1078
  %s1080 = vpop.sfrf %1079
  %p1081 = scmp.eq.s32.totalorder %s1080, 0
  %p1082 = pneg %p1081
  %1084 = shalt.err (%p1082)
  %s1085 = scalar_lea.sflag [#allocation3], 14
  %1086 = vsyncmov %s1085
  %s1087 = vpop.sfrf %1086
  %p1088 = scmp.eq.s32.totalorder %s1087, 0
  %p1089 = pneg %p1088
  %1091 = shalt.err (%p1089)
  %s1092 = scalar_lea.sflag [#allocation3], 15
  %1093 = vsyncmov %s1092
  %s1094 = vpop.sfrf %1093
  %p1095 = scmp.eq.s32.totalorder %s1094, 0
  %p1096 = pneg %p1095
  %1098 = shalt.err (%p1096)

</llo_original>
